<compile_context>
chip_gen: v6e
topology: v6e:2x2x1
jax: 0.10.0
libtpu: 0.0.40
codegen_flags: <defaults>
</compile_context>

<pallas_src>
import math

import jax
import jax.numpy as jnp
from jax import lax
from jax.experimental import pallas as pl
from jax.experimental.pallas import tpu as pltpu


_VMEM_LIMIT = 32 * 1024 * 1024   # safe scoped-VMEM cap on v5e/v6e/v7x (usage << this)


def _round_up(x, m):
    return ((x + m - 1) // m) * m


def _tiling(n):
    """Padded node count + square adjacency tile (adaptive to N)."""
    if n <= 1024:
        n_pad = max(_round_up(n, 128), 128)
        return n_pad, n_pad                       # single tile per axis
    n_pad = _round_up(n, 512)
    tile = 1024 if n_pad % 1024 == 0 else 512     # 1024 max: v7x-safe VMEM budget
    return n_pad, tile


# ----------------------------------------------------------------------------
# Kernel 1: GCNConv(normalize=False) + ReLU, grid = (row tiles, K tiles).
#   acc[i] = sum_k A[i,k] @ X[k]          (bf16 x bf16 -> f32 scratch)
#   out[i] = relu(acc[i] @ W + b)         (fused at the last K step)
# ----------------------------------------------------------------------------
def gcn_kernel(a_ref, x_ref, w_ref, b_ref, o_ref, acc_ref):
    k = pl.program_id(1)

    @pl.when(k == 0)
    def _():
        acc_ref[...] = jnp.zeros_like(acc_ref)

    # native bf16 MXU path, f32 accumulation; no f32 copy of the A tile.
    acc_ref[...] += jnp.dot(a_ref[...], x_ref[...],
                            preferred_element_type=jnp.float32)

    @pl.when(k == pl.num_programs(1) - 1)
    def _():
        h = jnp.dot(acc_ref[...], w_ref[...],
                    preferred_element_type=jnp.float32) + b_ref[...]
        o_ref[...] = jnp.maximum(h, 0.0).astype(o_ref.dtype)


def gcn_layer(a, x, w, b, *, tm, tk):
    n_pad = a.shape[0]
    c_in = x.shape[1]
    c_out = w.shape[1]
    return pl.pallas_call(
        gcn_kernel,
        out_shape=jax.ShapeDtypeStruct((n_pad, c_out), jnp.bfloat16),
        grid_spec=pltpu.PrefetchScalarGridSpec(
            num_scalar_prefetch=0,
            grid=(n_pad // tm, n_pad // tk),
            in_specs=[
                pl.BlockSpec((tm, tk), lambda i, k: (i, k)),       # A (bf16)
                pl.BlockSpec((tk, c_in), lambda i, k: (k, 0)),     # X (bf16)
                pl.BlockSpec((c_in, c_out), lambda i, k: (0, 0)),  # W (resident)
                pl.BlockSpec((1, c_out), lambda i, k: (0, 0)),     # bias
            ],
            out_specs=pl.BlockSpec((tm, c_out), lambda i, k: (i, 0)),
            scratch_shapes=[pltpu.VMEM((tm, c_in), jnp.float32)],
        ),
        compiler_params=pltpu.CompilerParams(
            dimension_semantics=("parallel", "arbitrary"),
            vmem_limit_bytes=_VMEM_LIMIT,
        ),
    )(a, x, w, b.reshape(1, c_out))


# ----------------------------------------------------------------------------
# Kernel 2: last GCN layer + fused DMoN cluster assignment.
#   h      = relu(acc @ W + b)                     (never written to HBM)
#   s      = softmax(h @ Wc + bc) * node_mask      (padded rows -> 0)
#   probs  = softmax(s)                            (module's returned value)
# ----------------------------------------------------------------------------
def gcn_assign_kernel(a_ref, x_ref, w_ref, b_ref, wc_ref, bc_ref, mask_ref,
                      s_ref, p_ref, acc_ref):
    k = pl.program_id(1)

    @pl.when(k == 0)
    def _():
        acc_ref[...] = jnp.zeros_like(acc_ref)

    acc_ref[...] += jnp.dot(a_ref[...], x_ref[...],
                            preferred_element_type=jnp.float32)

    @pl.when(k == pl.num_programs(1) - 1)
    def _():
        h = jnp.maximum(
            jnp.dot(acc_ref[...], w_ref[...],
                    preferred_element_type=jnp.float32) + b_ref[...], 0.0)
        logits = jnp.dot(h, wc_ref[...],
                         preferred_element_type=jnp.float32) + bc_ref[...]
        z = logits - jnp.max(logits, axis=-1, keepdims=True)
        e = jnp.exp(z)
        s = (e / jnp.sum(e, axis=-1, keepdims=True)) * mask_ref[...]
        s_ref[...] = s
        # reference quirk: the returned assignment is softmaxed a second time
        z2 = s - jnp.max(s, axis=-1, keepdims=True)
        e2 = jnp.exp(z2)
        p_ref[...] = e2 / jnp.sum(e2, axis=-1, keepdims=True)


def gcn_assign_layer(a, x, w, b, wc, bc, mask, *, tm, tk):
    n_pad = a.shape[0]
    c_in = x.shape[1]
    c_out = w.shape[1]
    c = wc.shape[1]
    return pl.pallas_call(
        gcn_assign_kernel,
        out_shape=(
            jax.ShapeDtypeStruct((n_pad, c), jnp.float32),
            jax.ShapeDtypeStruct((n_pad, c), jnp.float32),
        ),
        grid_spec=pltpu.PrefetchScalarGridSpec(
            num_scalar_prefetch=0,
            grid=(n_pad // tm, n_pad // tk),
            in_specs=[
                pl.BlockSpec((tm, tk), lambda i, k: (i, k)),       # A (bf16)
                pl.BlockSpec((tk, c_in), lambda i, k: (k, 0)),     # X (bf16)
                pl.BlockSpec((c_in, c_out), lambda i, k: (0, 0)),  # W
                pl.BlockSpec((1, c_out), lambda i, k: (0, 0)),     # b
                pl.BlockSpec((c_out, c), lambda i, k: (0, 0)),     # Wc
                pl.BlockSpec((1, c), lambda i, k: (0, 0)),         # bc
                pl.BlockSpec((tm, 1), lambda i, k: (i, 0)),        # node mask
            ],
            out_specs=[
                pl.BlockSpec((tm, c), lambda i, k: (i, 0)),
                pl.BlockSpec((tm, c), lambda i, k: (i, 0)),
            ],
            scratch_shapes=[pltpu.VMEM((tm, c_in), jnp.float32)],
        ),
        compiler_params=pltpu.CompilerParams(
            dimension_semantics=("parallel", "arbitrary"),
            vmem_limit_bytes=_VMEM_LIMIT,
        ),
    )(a, x, w, b.reshape(1, c_out), wc, bc.reshape(1, c), mask)


# ----------------------------------------------------------------------------
# Kernel 3: DMoN loss N^2 reductions, per-row-tile partials (megacore-friendly).
# With A stored as A_gcn[dst,src] = ADJ[src,dst]:
#   t = A_gcn[i,k] @ s[k]                       (bf16 x bf16 -> f32, MXU)
#   adjp[i] += s[i]^T t     -> sum_i adjp = S^T ADJ^T S  (same trace as S^T ADJ S)
#   cb[i]   += 1^T t        -> sum_i cb   = deg^T S      (deg = ADJ.sum(-1))
#   2m = sum(cb)   (padded rows of s are zero, real rows sum to 1)
# ----------------------------------------------------------------------------
def dmon_partial_kernel(a_ref, sc_ref, sr_ref, adjp_ref, cb_ref):
    k = pl.program_id(1)

    @pl.when(k == 0)
    def _():
        adjp_ref[...] = jnp.zeros_like(adjp_ref)
        cb_ref[...] = jnp.zeros_like(cb_ref)

    t = jnp.dot(a_ref[...], sc_ref[...], preferred_element_type=jnp.float32)  # [TM, C]
    adjp_ref[...] += lax.dot_general(
        sr_ref[...], t, (((0,), (0,)), ((), ())),
        preferred_element_type=jnp.float32)[None]                             # [1, C, C]
    cb_ref[...] += jnp.sum(t, axis=0, keepdims=True)[None]                    # [1, 1, C]


def dmon_loss_partials(a, s_bf16, s_f32, *, tm, tk):
    n_pad = a.shape[0]
    c = s_f32.shape[1]
    n_i = n_pad // tm
    return pl.pallas_call(
        dmon_partial_kernel,
        out_shape=(
            jax.ShapeDtypeStruct((n_i, c, c), jnp.float32),
            jax.ShapeDtypeStruct((n_i, 1, c), jnp.float32),
        ),
        grid_spec=pltpu.PrefetchScalarGridSpec(
            num_scalar_prefetch=0,
            grid=(n_i, n_pad // tk),
            in_specs=[
                pl.BlockSpec((tm, tk), lambda i, k: (i, k)),   # A (bf16)
                pl.BlockSpec((tk, c), lambda i, k: (k, 0)),    # s cols (bf16)
                pl.BlockSpec((tm, c), lambda i, k: (i, 0)),    # s rows (f32)
            ],
            out_specs=[
                pl.BlockSpec((1, c, c), lambda i, k: (i, 0, 0)),
                pl.BlockSpec((1, 1, c), lambda i, k: (i, 0, 0)),
            ],
        ),
        compiler_params=pltpu.CompilerParams(
            dimension_semantics=("parallel", "arbitrary"),
            vmem_limit_bytes=_VMEM_LIMIT,
        ),
    )(a, s_bf16, s_f32)


# ----------------------------------------------------------------------------
# DMoN forward
# ----------------------------------------------------------------------------
def dmon_forward(params, x, edge_index):
    n = x.shape[0]
    n_pad, tile = _tiling(n)

    src, dst = edge_index[0], edge_index[1]
    # Single dense adjacency copy, built directly in bf16 (small integer counts
    # are exact), stored in the GCN aggregation orientation A[dst, src].
    a = jnp.zeros((n_pad, n_pad), jnp.bfloat16).at[dst, src].add(1.0)

    node_mask = (jnp.arange(n_pad) < n).astype(jnp.float32).reshape(n_pad, 1)

    # NOTE: the reference also runs `self.mlp(x)` but immediately overwrites
    # that value with DMoNPooling's own assignment, so it never affects the
    # returned (softmax(s), loss) pair and is not computed here.  Likewise the
    # unused DMoNPooling side outputs (selu(s^T x) and the renormalized coarse
    # adjacency) and its F.dropout (p=0.0) are skipped.
    h = jnp.pad(x, ((0, n_pad - n), (0, 0))).astype(jnp.bfloat16)
    mp = params["mp"]
    for (w, b) in mp[:-1]:
        h = gcn_layer(a, h, w, b, tm=tile, tk=tile)
    w_last, b_last = mp[-1]
    s, probs = gcn_assign_layer(a, h, w_last, b_last,
                                params["pool_w"], params["pool_b"],
                                node_mask, tm=tile, tk=tile)

    # N^2 loss reductions in Pallas, tiny finalize in plain JAX (N x C data).
    adjp, cbp = dmon_loss_partials(a, s.astype(jnp.bfloat16), s, tm=tile, tk=tile)

    c = s.shape[1]
    tr_out = jnp.trace(jnp.sum(adjp, axis=0))    # tr(S^T ADJ S)
    cb = jnp.sum(cbp, axis=(0, 1))               # deg^T S, shape (C,)
    two_m = jnp.sum(cb)                          # sum of degrees (= #edges)
    # NOTE: an edgeless graph gives two_m == 0 -> NaN, same as the reference.
    spectral = -(tr_out - jnp.sum(cb * cb) / two_m) / two_m

    ss = s.T @ s                                 # (C, C), s already masked
    ss_fro = jnp.sqrt(jnp.sum(ss * ss))
    eye = jnp.eye(c, dtype=jnp.float32)
    diff = ss / ss_fro - eye * (1.0 / math.sqrt(c))
    ortho = jnp.sqrt(jnp.sum(diff * diff))

    cs = jnp.sum(s, axis=0)                      # cluster sizes, (C,)
    cluster = jnp.sqrt(jnp.sum(cs * cs)) * (math.sqrt(c) / float(n)) - 1.0

    loss = spectral + ortho + cluster
    return probs[:n], loss


# ----------------------------------------------------------------------------
# Deterministic parameter init (shapes follow the module's __init__)
# ----------------------------------------------------------------------------
def init_params(key, in_channels, mp_units, n_clusters):
    params = {"mp": []}
    dims = [in_channels] + list(mp_units)
    for i in range(len(mp_units)):
        key, kw = jax.random.split(key)
        w = 0.1 * jax.random.normal(kw, (dims[i], dims[i + 1]), jnp.float32)
        b = jnp.zeros((dims[i + 1],), jnp.float32)
        params["mp"].append((w, b))
    key, kp = jax.random.split(key)
    # DMoNPooling's internal assignment MLP == single Linear(mp_units[-1], k).
    params["pool_w"] = 0.1 * jax.random.normal(
        kp, (mp_units[-1], n_clusters), jnp.float32)
    params["pool_b"] = jnp.zeros((n_clusters,), jnp.float32)
    return params


if __name__ == "__main__":
    key = jax.random.PRNGKey(0)

    in_channels = 4
    mp_units = [32, 32]      # two GCNConv layers, ReLU message-passing act
    n_clusters = 4
    num_nodes = 16
    num_edges = 32

    key, kx, ke = jax.random.split(key, 3)
    x = jax.random.normal(kx, (num_nodes, in_channels), jnp.float32)
    edge_index = jax.random.randint(ke, (2, num_edges), 0, num_nodes, jnp.int32)

    params = init_params(key, in_channels, mp_units, n_clusters)

    fwd = jax.jit(dmon_forward)
    probs, loss = fwd(params, x, edge_index)
    jax.block_until_ready((probs, loss))

    assert probs.shape == (num_nodes, n_clusters)
    # returned cluster probabilities are a softmax -> rows sum to 1
    assert jnp.allclose(jnp.sum(probs, axis=-1), 1.0, atol=1e-4)
    assert bool(jnp.isfinite(loss))

    print("KERNEL_OK")
</pallas_src>

<mosaic_0001>
module attributes {stable_mosaic.version = 11 : i64} {
  func.func @gcn_assign_kernel(%arg0: i32, %arg1: i32, %arg2: memref<128x128xbf16, #tpu.memory_space<vmem>>, %arg3: memref<128x32xbf16, #tpu.memory_space<vmem>>, %arg4: memref<32x32xf32, #tpu.memory_space<vmem>>, %arg5: memref<1x32xf32, #tpu.memory_space<vmem>>, %arg6: memref<32x4xf32, #tpu.memory_space<vmem>>, %arg7: memref<1x4xf32, #tpu.memory_space<vmem>>, %arg8: memref<128x1xf32, #tpu.memory_space<vmem>>, %arg9: memref<128x4xf32, #tpu.memory_space<vmem>>, %arg10: memref<128x4xf32, #tpu.memory_space<vmem>>, %arg11: memref<128x32xf32, #tpu.memory_space<vmem>>) attributes {dimension_semantics = [#tpu.dimension_semantics<parallel>, #tpu.dimension_semantics<arbitrary>], iteration_bounds = array<i64: 1, 1>, scalar_prefetch = 0 : i64, scratch_operands = 1 : i64, tpu.core_type = #tpu.core_type<tc>, window_params = [{transform_indices = @transform_0, window_bounds = array<i64: 128, 128>}, {transform_indices = @transform_1, window_bounds = array<i64: 128, 32>}, {pipeline_mode = #tpu.pipeline_mode<synchronous>, transform_indices = @transform_2, window_bounds = array<i64: 32, 32>}, {pipeline_mode = #tpu.pipeline_mode<synchronous>, transform_indices = @transform_3, window_bounds = array<i64: 1, 32>}, {pipeline_mode = #tpu.pipeline_mode<synchronous>, transform_indices = @transform_4, window_bounds = array<i64: 32, 4>}, {pipeline_mode = #tpu.pipeline_mode<synchronous>, transform_indices = @transform_5, window_bounds = array<i64: 1, 4>}, {transform_indices = @transform_6, window_bounds = array<i64: 128, 1>}, {transform_indices = @transform_7, window_bounds = array<i64: 128, 4>}, {transform_indices = @transform_8, window_bounds = array<i64: 128, 4>}]} {
    %c0_i32 = arith.constant 0 : i32
    %0 = arith.cmpi eq, %arg1, %c0_i32 : i32
    %1 = arith.extui %0 : i1 to i32
    %c0_i32_0 = arith.constant 0 : i32
    %2 = arith.cmpi ne, %1, %c0_i32_0 : i32
    scf.if %2 {
      %cst_10 = arith.constant 0.000000e+00 : f32
      %12 = vector.broadcast %cst_10 : f32 to vector<128x32xf32>
      %c0_11 = arith.constant 0 : index
      %c0_12 = arith.constant 0 : index
      %13 = vector.load %arg11[%c0_11, %c0_12] : memref<128x32xf32, #tpu.memory_space<vmem>>, vector<128x32xf32>
      tpu.vector_store %arg11[%c0_11, %c0_12], %12 {strides = array<i32>} : memref<128x32xf32, #tpu.memory_space<vmem>>, vector<128x32xf32>,
    } else {
    }
    %c0 = arith.constant 0 : index
    %c0_1 = arith.constant 0 : index
    %3 = vector.load %arg11[%c0, %c0_1] : memref<128x32xf32, #tpu.memory_space<vmem>>, vector<128x32xf32>
    %c0_2 = arith.constant 0 : index
    %c0_3 = arith.constant 0 : index
    %4 = vector.load %arg2[%c0_2, %c0_3] : memref<128x128xbf16, #tpu.memory_space<vmem>>, vector<128x128xbf16>
    %c0_4 = arith.constant 0 : index
    %c0_5 = arith.constant 0 : index
    %5 = vector.load %arg3[%c0_4, %c0_5] : memref<128x32xbf16, #tpu.memory_space<vmem>>, vector<128x32xbf16>
    %cst = arith.constant dense<0.000000e+00> : vector<128x32xf32>
    %6 = tpu.matmul %4, %5, %cst {dimension_numbers = #tpu.dot_dimension_numbers<[1], [0], [0], [1], [0, 0, 1, 1], [], []>} : vector<128x128xbf16>, vector<128x32xbf16>, vector<128x32xf32> -> vector<128x32xf32>
    %7 = arith.addf %3, %6 : vector<128x32xf32>
    %c0_6 = arith.constant 0 : index
    %c0_7 = arith.constant 0 : index
    %8 = vector.load %arg11[%c0_6, %c0_7] : memref<128x32xf32, #tpu.memory_space<vmem>>, vector<128x32xf32>
    tpu.vector_store %arg11[%c0_6, %c0_7], %7 {strides = array<i32>} : memref<128x32xf32, #tpu.memory_space<vmem>>, vector<128x32xf32>,
    %c0_i32_8 = arith.constant 0 : i32
    %9 = arith.cmpi eq, %arg1, %c0_i32_8 : i32
    %10 = arith.extui %9 : i1 to i32
    %c0_i32_9 = arith.constant 0 : i32
    %11 = arith.cmpi ne, %10, %c0_i32_9 : i32
    scf.if %11 {
      %c0_10 = arith.constant 0 : index
      %c0_11 = arith.constant 0 : index
      %12 = vector.load %arg11[%c0_10, %c0_11] : memref<128x32xf32, #tpu.memory_space<vmem>>, vector<128x32xf32>
      %c0_12 = arith.constant 0 : index
      %c0_13 = arith.constant 0 : index
      %13 = vector.load %arg4[%c0_12, %c0_13] : memref<32x32xf32, #tpu.memory_space<vmem>>, vector<32x32xf32>
      %cst_14 = arith.constant dense<0.000000e+00> : vector<128x32xf32>
      %14 = tpu.matmul %12, %13, %cst_14 {dimension_numbers = #tpu.dot_dimension_numbers<[1], [0], [0], [1], [0, 0, 1, 1], [], []>} : vector<128x32xf32>, vector<32x32xf32>, vector<128x32xf32> -> vector<128x32xf32>
      %c0_15 = arith.constant 0 : index
      %c0_16 = arith.constant 0 : index
      %15 = vector.load %arg5[%c0_15, %c0_16] : memref<1x32xf32, #tpu.memory_space<vmem>>, vector<1x32xf32>
      %16 = vector.broadcast %15 : vector<1x32xf32> to vector<128x32xf32>
      %17 = arith.addf %14, %16 : vector<128x32xf32>
      %cst_17 = arith.constant 0.000000e+00 : f32
      %18 = vector.broadcast %cst_17 : f32 to vector<128x32xf32>
      %19 = arith.maximumf %17, %18 : vector<128x32xf32>
      %c0_18 = arith.constant 0 : index
      %c0_19 = arith.constant 0 : index
      %20 = vector.load %arg6[%c0_18, %c0_19] : memref<32x4xf32, #tpu.memory_space<vmem>>, vector<32x4xf32>
      %cst_20 = arith.constant dense<0.000000e+00> : vector<128x4xf32>
      %21 = tpu.matmul %19, %20, %cst_20 {dimension_numbers = #tpu.dot_dimension_numbers<[1], [0], [0], [1], [0, 0, 1, 1], [], []>} : vector<128x32xf32>, vector<32x4xf32>, vector<128x4xf32> -> vector<128x4xf32>
      %c0_21 = arith.constant 0 : index
      %c0_22 = arith.constant 0 : index
      %22 = vector.load %arg7[%c0_21, %c0_22] : memref<1x4xf32, #tpu.memory_space<vmem>>, vector<1x4xf32>
      %23 = vector.broadcast %22 : vector<1x4xf32> to vector<128x4xf32>
      %24 = arith.addf %21, %23 : vector<128x4xf32>
      %cst_23 = arith.constant dense<0xFF800000> : vector<128xf32>
      %25 = vector.multi_reduction <maximumf>, %24, %cst_23 [1] : vector<128x4xf32> to vector<128xf32>
      %26 = vector.shape_cast %25 : vector<128xf32> to vector<128x1xf32>
      %27 = vector.broadcast %26 : vector<128x1xf32> to vector<128x4xf32>
      %28 = arith.subf %24, %27 : vector<128x4xf32>
      %29 = math.exp %28 : vector<128x4xf32>
      %cst_24 = arith.constant dense<0.000000e+00> : vector<128xf32>
      %30 = vector.multi_reduction <add>, %29, %cst_24 [1] : vector<128x4xf32> to vector<128xf32>
      %31 = vector.shape_cast %30 : vector<128xf32> to vector<128x1xf32>
      %32 = vector.broadcast %31 : vector<128x1xf32> to vector<128x4xf32>
      %33 = arith.divf %29, %32 : vector<128x4xf32>
      %c0_25 = arith.constant 0 : index
      %c0_26 = arith.constant 0 : index
      %34 = vector.load %arg8[%c0_25, %c0_26] : memref<128x1xf32, #tpu.memory_space<vmem>>, vector<128x1xf32>
      %35 = vector.broadcast %34 : vector<128x1xf32> to vector<128x4xf32>
      %36 = arith.mulf %33, %35 : vector<128x4xf32>
      %c0_27 = arith.constant 0 : index
      %c0_28 = arith.constant 0 : index
      %37 = vector.load %arg9[%c0_27, %c0_28] : memref<128x4xf32, #tpu.memory_space<vmem>>, vector<128x4xf32>
      tpu.vector_store %arg9[%c0_27, %c0_28], %36 {strides = array<i32>} : memref<128x4xf32, #tpu.memory_space<vmem>>, vector<128x4xf32>,
      %cst_29 = arith.constant dense<0xFF800000> : vector<128xf32>
      %38 = vector.multi_reduction <maximumf>, %36, %cst_29 [1] : vector<128x4xf32> to vector<128xf32>
      %39 = vector.shape_cast %38 : vector<128xf32> to vector<128x1xf32>
      %40 = vector.broadcast %39 : vector<128x1xf32> to vector<128x4xf32>
      %41 = arith.subf %36, %40 : vector<128x4xf32>
      %42 = math.exp %41 : vector<128x4xf32>
      %cst_30 = arith.constant dense<0.000000e+00> : vector<128xf32>
      %43 = vector.multi_reduction <add>, %42, %cst_30 [1] : vector<128x4xf32> to vector<128xf32>
      %44 = vector.shape_cast %43 : vector<128xf32> to vector<128x1xf32>
      %45 = vector.broadcast %44 : vector<128x1xf32> to vector<128x4xf32>
      %46 = arith.divf %42, %45 : vector<128x4xf32>
      %c0_31 = arith.constant 0 : index
      %c0_32 = arith.constant 0 : index
      %47 = vector.load %arg10[%c0_31, %c0_32] : memref<128x4xf32, #tpu.memory_space<vmem>>, vector<128x4xf32>
      tpu.vector_store %arg10[%c0_31, %c0_32], %46 {strides = array<i32>} : memref<128x4xf32, #tpu.memory_space<vmem>>, vector<128x4xf32>,
    } else {
    }
    return
  }
  func.func @transform_0(%arg0: i32, %arg1: i32) -> (i32, i32) {
    %c0_i32 = arith.constant 0 : i32
    return %arg0, %arg1 : i32, i32
  }
  func.func @transform_1(%arg0: i32, %arg1: i32) -> (i32, i32) {
    %c0_i32 = arith.constant 0 : i32
    %c0_i32_0 = arith.constant 0 : i32
    return %arg1, %c0_i32 : i32, i32
  }
  func.func @transform_2(%arg0: i32, %arg1: i32) -> (i32, i32) {
    %c0_i32 = arith.constant 0 : i32
    %c0_i32_0 = arith.constant 0 : i32
    %c0_i32_1 = arith.constant 0 : i32
    return %c0_i32, %c0_i32_0 : i32, i32
  }
  func.func @transform_3(%arg0: i32, %arg1: i32) -> (i32, i32) {
    %c0_i32 = arith.constant 0 : i32
    %c0_i32_0 = arith.constant 0 : i32
    %c0_i32_1 = arith.constant 0 : i32
    return %c0_i32, %c0_i32_0 : i32, i32
  }
  func.func @transform_4(%arg0: i32, %arg1: i32) -> (i32, i32) {
    %c0_i32 = arith.constant 0 : i32
    %c0_i32_0 = arith.constant 0 : i32
    %c0_i32_1 = arith.constant 0 : i32
    return %c0_i32, %c0_i32_0 : i32, i32
  }
  func.func @transform_5(%arg0: i32, %arg1: i32) -> (i32, i32) {
    %c0_i32 = arith.constant 0 : i32
    %c0_i32_0 = arith.constant 0 : i32
    %c0_i32_1 = arith.constant 0 : i32
    return %c0_i32, %c0_i32_0 : i32, i32
  }
  func.func @transform_6(%arg0: i32, %arg1: i32) -> (i32, i32) {
    %c0_i32 = arith.constant 0 : i32
    %c0_i32_0 = arith.constant 0 : i32
    return %arg0, %c0_i32 : i32, i32
  }
  func.func @transform_7(%arg0: i32, %arg1: i32) -> (i32, i32) {
    %c0_i32 = arith.constant 0 : i32
    %c0_i32_0 = arith.constant 0 : i32
    return %arg0, %c0_i32 : i32, i32
  }
  func.func @transform_8(%arg0: i32, %arg1: i32) -> (i32, i32) {
    %c0_i32 = arith.constant 0 : i32
    %c0_i32_0 = arith.constant 0 : i32
    return %arg0, %c0_i32 : i32, i32
  }
}

module attributes {stable_mosaic.version = 11 : i64} {
  func.func @gcn_kernel(%arg0: i32, %arg1: i32, %arg2: memref<128x128xbf16, #tpu.memory_space<vmem>>, %arg3: memref<128x4xbf16, #tpu.memory_space<vmem>>, %arg4: memref<4x32xf32, #tpu.memory_space<vmem>>, %arg5: memref<1x32xf32, #tpu.memory_space<vmem>>, %arg6: memref<128x32xbf16, #tpu.memory_space<vmem>>, %arg7: memref<128x4xf32, #tpu.memory_space<vmem>>) attributes {dimension_semantics = [#tpu.dimension_semantics<parallel>, #tpu.dimension_semantics<arbitrary>], iteration_bounds = array<i64: 1, 1>, scalar_prefetch = 0 : i64, scratch_operands = 1 : i64, tpu.core_type = #tpu.core_type<tc>, window_params = [{transform_indices = @transform_0, window_bounds = array<i64: 128, 128>}, {transform_indices = @transform_1, window_bounds = array<i64: 128, 4>}, {pipeline_mode = #tpu.pipeline_mode<synchronous>, transform_indices = @transform_2, window_bounds = array<i64: 4, 32>}, {pipeline_mode = #tpu.pipeline_mode<synchronous>, transform_indices = @transform_3, window_bounds = array<i64: 1, 32>}, {transform_indices = @transform_4, window_bounds = array<i64: 128, 32>}]} {
    %c0_i32 = arith.constant 0 : i32
    %0 = arith.cmpi eq, %arg1, %c0_i32 : i32
    %1 = arith.extui %0 : i1 to i32
    %c0_i32_0 = arith.constant 0 : i32
    %2 = arith.cmpi ne, %1, %c0_i32_0 : i32
    scf.if %2 {
      %cst_10 = arith.constant 0.000000e+00 : f32
      %12 = vector.broadcast %cst_10 : f32 to vector<128x4xf32>
      %c0_11 = arith.constant 0 : index
      %c0_12 = arith.constant 0 : index
      %13 = vector.load %arg7[%c0_11, %c0_12] : memref<128x4xf32, #tpu.memory_space<vmem>>, vector<128x4xf32>
      tpu.vector_store %arg7[%c0_11, %c0_12], %12 {strides = array<i32>} : memref<128x4xf32, #tpu.memory_space<vmem>>, vector<128x4xf32>,
    } else {
    }
    %c0 = arith.constant 0 : index
    %c0_1 = arith.constant 0 : index
    %3 = vector.load %arg7[%c0, %c0_1] : memref<128x4xf32, #tpu.memory_space<vmem>>, vector<128x4xf32>
    %c0_2 = arith.constant 0 : index
    %c0_3 = arith.constant 0 : index
    %4 = vector.load %arg2[%c0_2, %c0_3] : memref<128x128xbf16, #tpu.memory_space<vmem>>, vector<128x128xbf16>
    %c0_4 = arith.constant 0 : index
    %c0_5 = arith.constant 0 : index
    %5 = vector.load %arg3[%c0_4, %c0_5] : memref<128x4xbf16, #tpu.memory_space<vmem>>, vector<128x4xbf16>
    %cst = arith.constant dense<0.000000e+00> : vector<128x4xf32>
    %6 = tpu.matmul %4, %5, %cst {dimension_numbers = #tpu.dot_dimension_numbers<[1], [0], [0], [1], [0, 0, 1, 1], [], []>} : vector<128x128xbf16>, vector<128x4xbf16>, vector<128x4xf32> -> vector<128x4xf32>
    %7 = arith.addf %3, %6 : vector<128x4xf32>
    %c0_6 = arith.constant 0 : index
    %c0_7 = arith.constant 0 : index
    %8 = vector.load %arg7[%c0_6, %c0_7] : memref<128x4xf32, #tpu.memory_space<vmem>>, vector<128x4xf32>
    tpu.vector_store %arg7[%c0_6, %c0_7], %7 {strides = array<i32>} : memref<128x4xf32, #tpu.memory_space<vmem>>, vector<128x4xf32>,
    %c0_i32_8 = arith.constant 0 : i32
    %9 = arith.cmpi eq, %arg1, %c0_i32_8 : i32
    %10 = arith.extui %9 : i1 to i32
    %c0_i32_9 = arith.constant 0 : i32
    %11 = arith.cmpi ne, %10, %c0_i32_9 : i32
    scf.if %11 {
      %c0_10 = arith.constant 0 : index
      %c0_11 = arith.constant 0 : index
      %12 = vector.load %arg7[%c0_10, %c0_11] : memref<128x4xf32, #tpu.memory_space<vmem>>, vector<128x4xf32>
      %c0_12 = arith.constant 0 : index
      %c0_13 = arith.constant 0 : index
      %13 = vector.load %arg4[%c0_12, %c0_13] : memref<4x32xf32, #tpu.memory_space<vmem>>, vector<4x32xf32>
      %cst_14 = arith.constant dense<0.000000e+00> : vector<128x32xf32>
      %14 = tpu.matmul %12, %13, %cst_14 {dimension_numbers = #tpu.dot_dimension_numbers<[1], [0], [0], [1], [0, 0, 1, 1], [], []>} : vector<128x4xf32>, vector<4x32xf32>, vector<128x32xf32> -> vector<128x32xf32>
      %c0_15 = arith.constant 0 : index
      %c0_16 = arith.constant 0 : index
      %15 = vector.load %arg5[%c0_15, %c0_16] : memref<1x32xf32, #tpu.memory_space<vmem>>, vector<1x32xf32>
      %16 = vector.broadcast %15 : vector<1x32xf32> to vector<128x32xf32>
      %17 = arith.addf %14, %16 : vector<128x32xf32>
      %cst_17 = arith.constant 0.000000e+00 : f32
      %18 = vector.broadcast %cst_17 : f32 to vector<128x32xf32>
      %19 = arith.maximumf %17, %18 : vector<128x32xf32>
      %20 = arith.truncf %19 : vector<128x32xf32> to vector<128x32xbf16>
      %c0_18 = arith.constant 0 : index
      %c0_19 = arith.constant 0 : index
      %21 = vector.load %arg6[%c0_18, %c0_19] : memref<128x32xbf16, #tpu.memory_space<vmem>>, vector<128x32xbf16>
      tpu.vector_store %arg6[%c0_18, %c0_19], %20 {strides = array<i32>} : memref<128x32xbf16, #tpu.memory_space<vmem>>, vector<128x32xbf16>,
    } else {
    }
    return
  }
  func.func @transform_0(%arg0: i32, %arg1: i32) -> (i32, i32) {
    %c0_i32 = arith.constant 0 : i32
    return %arg0, %arg1 : i32, i32
  }
  func.func @transform_1(%arg0: i32, %arg1: i32) -> (i32, i32) {
    %c0_i32 = arith.constant 0 : i32
    %c0_i32_0 = arith.constant 0 : i32
    return %arg1, %c0_i32 : i32, i32
  }
  func.func @transform_2(%arg0: i32, %arg1: i32) -> (i32, i32) {
    %c0_i32 = arith.constant 0 : i32
    %c0_i32_0 = arith.constant 0 : i32
    %c0_i32_1 = arith.constant 0 : i32
    return %c0_i32, %c0_i32_0 : i32, i32
  }
  func.func @transform_3(%arg0: i32, %arg1: i32) -> (i32, i32) {
    %c0_i32 = arith.constant 0 : i32
    %c0_i32_0 = arith.constant 0 : i32
    %c0_i32_1 = arith.constant 0 : i32
    return %c0_i32, %c0_i32_0 : i32, i32
  }
  func.func @transform_4(%arg0: i32, %arg1: i32) -> (i32, i32) {
    %c0_i32 = arith.constant 0 : i32
    %c0_i32_0 = arith.constant 0 : i32
    return %arg0, %c0_i32 : i32, i32
  }
}

module attributes {stable_mosaic.version = 11 : i64} {
  func.func @dmon_partial_kernel(%arg0: i32, %arg1: i32, %arg2: memref<128x128xbf16, #tpu.memory_space<vmem>>, %arg3: memref<128x4xbf16, #tpu.memory_space<vmem>>, %arg4: memref<128x4xf32, #tpu.memory_space<vmem>>, %arg5: memref<1x4x4xf32, #tpu.memory_space<vmem>>, %arg6: memref<1x1x4xf32, #tpu.memory_space<vmem>>) attributes {dimension_semantics = [#tpu.dimension_semantics<parallel>, #tpu.dimension_semantics<arbitrary>], iteration_bounds = array<i64: 1, 1>, scalar_prefetch = 0 : i64, scratch_operands = 0 : i64, tpu.core_type = #tpu.core_type<tc>, window_params = [{transform_indices = @transform_0, window_bounds = array<i64: 128, 128>}, {transform_indices = @transform_1, window_bounds = array<i64: 128, 4>}, {transform_indices = @transform_2, window_bounds = array<i64: 128, 4>}, {transform_indices = @transform_3, window_bounds = array<i64: 1, 4, 4>}, {transform_indices = @transform_4, window_bounds = array<i64: 1, 1, 4>}]} {
    %c0_i32 = arith.constant 0 : i32
    %0 = arith.cmpi eq, %arg1, %c0_i32 : i32
    %1 = arith.extui %0 : i1 to i32
    %c0_i32_0 = arith.constant 0 : i32
    %2 = arith.cmpi ne, %1, %c0_i32_0 : i32
    scf.if %2 {
      %cst_20 = arith.constant 0.000000e+00 : f32
      %18 = vector.broadcast %cst_20 : f32 to vector<1x4x4xf32>
      %c0_21 = arith.constant 0 : index
      %c0_22 = arith.constant 0 : index
      %c0_23 = arith.constant 0 : index
      %19 = vector.load %arg5[%c0_21, %c0_22, %c0_23] : memref<1x4x4xf32, #tpu.memory_space<vmem>>, vector<1x4x4xf32>
      tpu.vector_store %arg5[%c0_21, %c0_22, %c0_23], %18 {strides = array<i32>} : memref<1x4x4xf32, #tpu.memory_space<vmem>>, vector<1x4x4xf32>,
      %cst_24 = arith.constant 0.000000e+00 : f32
      %20 = vector.broadcast %cst_24 : f32 to vector<1x1x4xf32>
      %c0_25 = arith.constant 0 : index
      %c0_26 = arith.constant 0 : index
      %c0_27 = arith.constant 0 : index
      %21 = vector.load %arg6[%c0_25, %c0_26, %c0_27] : memref<1x1x4xf32, #tpu.memory_space<vmem>>, vector<1x1x4xf32>
      tpu.vector_store %arg6[%c0_25, %c0_26, %c0_27], %20 {strides = array<i32>} : memref<1x1x4xf32, #tpu.memory_space<vmem>>, vector<1x1x4xf32>,
    } else {
    }
    %c0 = arith.constant 0 : index
    %c0_1 = arith.constant 0 : index
    %3 = vector.load %arg2[%c0, %c0_1] : memref<128x128xbf16, #tpu.memory_space<vmem>>, vector<128x128xbf16>
    %c0_2 = arith.constant 0 : index
    %c0_3 = arith.constant 0 : index
    %4 = vector.load %arg3[%c0_2, %c0_3] : memref<128x4xbf16, #tpu.memory_space<vmem>>, vector<128x4xbf16>
    %cst = arith.constant dense<0.000000e+00> : vector<128x4xf32>
    %5 = tpu.matmul %3, %4, %cst {dimension_numbers = #tpu.dot_dimension_numbers<[1], [0], [0], [1], [0, 0, 1, 1], [], []>} : vector<128x128xbf16>, vector<128x4xbf16>, vector<128x4xf32> -> vector<128x4xf32>
    %c0_4 = arith.constant 0 : index
    %c0_5 = arith.constant 0 : index
    %c0_6 = arith.constant 0 : index
    %6 = vector.load %arg5[%c0_4, %c0_5, %c0_6] : memref<1x4x4xf32, #tpu.memory_space<vmem>>, vector<1x4x4xf32>
    %c0_7 = arith.constant 0 : index
    %c0_8 = arith.constant 0 : index
    %7 = vector.load %arg4[%c0_7, %c0_8] : memref<128x4xf32, #tpu.memory_space<vmem>>, vector<128x4xf32>
    %cst_9 = arith.constant dense<0.000000e+00> : vector<4x4xf32>
    %8 = tpu.matmul %7, %5, %cst_9 {dimension_numbers = #tpu.dot_dimension_numbers<[0], [0], [1], [1], [0, 1, 1, 1], [], []>} : vector<128x4xf32>, vector<128x4xf32>, vector<4x4xf32> -> vector<4x4xf32>
    %9 = vector.shape_cast %8 : vector<4x4xf32> to vector<1x4x4xf32>
    %10 = arith.addf %6, %9 : vector<1x4x4xf32>
    %c0_10 = arith.constant 0 : index
    %c0_11 = arith.constant 0 : index
    %c0_12 = arith.constant 0 : index
    %11 = vector.load %arg5[%c0_10, %c0_11, %c0_12] : memref<1x4x4xf32, #tpu.memory_space<vmem>>, vector<1x4x4xf32>
    tpu.vector_store %arg5[%c0_10, %c0_11, %c0_12], %10 {strides = array<i32>} : memref<1x4x4xf32, #tpu.memory_space<vmem>>, vector<1x4x4xf32>,
    %c0_13 = arith.constant 0 : index
    %c0_14 = arith.constant 0 : index
    %c0_15 = arith.constant 0 : index
    %12 = vector.load %arg6[%c0_13, %c0_14, %c0_15] : memref<1x1x4xf32, #tpu.memory_space<vmem>>, vector<1x1x4xf32>
    %cst_16 = arith.constant dense<0.000000e+00> : vector<4xf32>
    %13 = vector.multi_reduction <add>, %5, %cst_16 [0] : vector<128x4xf32> to vector<4xf32>
    %14 = vector.shape_cast %13 : vector<4xf32> to vector<1x4xf32>
    %15 = vector.shape_cast %14 : vector<1x4xf32> to vector<1x1x4xf32>
    %16 = arith.addf %12, %15 : vector<1x1x4xf32>
    %c0_17 = arith.constant 0 : index
    %c0_18 = arith.constant 0 : index
    %c0_19 = arith.constant 0 : index
    %17 = vector.load %arg6[%c0_17, %c0_18, %c0_19] : memref<1x1x4xf32, #tpu.memory_space<vmem>>, vector<1x1x4xf32>
    tpu.vector_store %arg6[%c0_17, %c0_18, %c0_19], %16 {strides = array<i32>} : memref<1x1x4xf32, #tpu.memory_space<vmem>>, vector<1x1x4xf32>,
    return
  }
  func.func @transform_0(%arg0: i32, %arg1: i32) -> (i32, i32) {
    %c0_i32 = arith.constant 0 : i32
    return %arg0, %arg1 : i32, i32
  }
  func.func @transform_1(%arg0: i32, %arg1: i32) -> (i32, i32) {
    %c0_i32 = arith.constant 0 : i32
    %c0_i32_0 = arith.constant 0 : i32
    return %arg1, %c0_i32 : i32, i32
  }
  func.func @transform_2(%arg0: i32, %arg1: i32) -> (i32, i32) {
    %c0_i32 = arith.constant 0 : i32
    %c0_i32_0 = arith.constant 0 : i32
    return %arg0, %c0_i32 : i32, i32
  }
  func.func @transform_3(%arg0: i32, %arg1: i32) -> (i32, i32, i32) {
    %c0_i32 = arith.constant 0 : i32
    %c0_i32_0 = arith.constant 0 : i32
    %c0_i32_1 = arith.constant 0 : i32
    return %arg0, %c0_i32, %c0_i32_0 : i32, i32, i32
  }
  func.func @transform_4(%arg0: i32, %arg1: i32) -> (i32, i32, i32) {
    %c0_i32 = arith.constant 0 : i32
    %c0_i32_0 = arith.constant 0 : i32
    %c0_i32_1 = arith.constant 0 : i32
    return %arg0, %c0_i32, %c0_i32_0 : i32, i32, i32
  }
}

</mosaic_0001>

<llo_original>
// kernel: dmon_forward.4
$region0: #{dmon_forward.4}
  #allocation0 [shape = 'u32[]', space=smem, size = 0x4, offset = 0x4, fixed_abs, tag = 'smem constant byte address 0x4 - core index']
  #allocation1 [shape = 'u32[144,128]{1,0:T(1,128)}', space=vmem, size = 0x12000, scoped, tag = 'internal scratch']
  #allocation2 [shape = 'f32[128,32]{1,0:T(8,128)}', space=vmem, size = 0x10000, scoped, tag = 'scratch operand']
  %s0 = inlined_call_operand.vmem [shape: bf16[128,128], index: 0, kind: input, shape index: {}]
  %s1 = inlined_call_operand.vmem [shape: bf16[128,32], index: 1, kind: input, shape index: {}]
  %s2 = inlined_call_operand.vmem [shape: f32[32,32], index: 2, kind: input, shape index: {}]
  %s3 = inlined_call_operand.vmem [shape: f32[1,32], index: 3, kind: input, shape index: {}]
  %s4 = inlined_call_operand.vmem [shape: f32[32,4], index: 4, kind: input, shape index: {}]
  %s5 = inlined_call_operand.vmem [shape: f32[1,4], index: 5, kind: input, shape index: {}]
  %s6 = inlined_call_operand.vmem [shape: f32[128,1], index: 6, kind: input, shape index: {}]
  %s7 = inlined_call_operand.vmem [shape: f32[128,4], index: 7, kind: output, shape index: {0}]
  %s8 = inlined_call_operand.vmem [shape: f32[128,4], index: 8, kind: output, shape index: {1}]
  %9 = xla_tuple %s7, %s8
  %s10 = sld [smem:[#allocation0]]
  $region54: #{dmon_forward.4} parent=0
    _
  %s12 = ssub.s32 1, %s10
  %s13 = scalar_select 0, %s12, %s10
  // Predicated region
  $region2: #{dmon_forward.4} parent=0 // pred_check
    _
  $region3: #{dmon_forward.4} parent=0 // pred_check_branch
    %15 = sbr.rel (0) target = $region5
  $region4: #{dmon_forward.4} parent=0 // pred_region
    _
  $region5: #{dmon_forward.4} parent=0 // pred_fallthru
    _
  // Predicated region
  $region6: #{dmon_forward.4} parent=0 // pred_check
    _
  $region7: #{dmon_forward.4} parent=0 // pred_check_branch
    %17 = sbr.rel (0) target = $region9
  $region8: #{dmon_forward.4} parent=0 // pred_region
    _
  $region9: #{dmon_forward.4} parent=0 // pred_fallthru
    _
  // Predicated region
  $region10: #{dmon_forward.4} parent=0 // pred_check
    _
  $region11: #{dmon_forward.4} parent=0 // pred_check_branch
    %19 = sbr.rel (0) target = $region13
  $region12: #{dmon_forward.4} parent=0 // pred_region
    _
  $region13: #{dmon_forward.4} parent=0 // pred_fallthru
    _
  // Predicated region
  $region14: #{dmon_forward.4} parent=0 // pred_check
    _
  $region15: #{dmon_forward.4} parent=0 // pred_check_branch
    %21 = sbr.rel (0) target = $region17
  $region16: #{dmon_forward.4} parent=0 // pred_region
    _
  $region17: #{dmon_forward.4} parent=0 // pred_fallthru
    _
  // Predicated region
  $region18: #{dmon_forward.4} parent=0 // pred_check
    _
  $region19: #{dmon_forward.4} parent=0 // pred_check_branch
    %23 = sbr.rel (0) target = $region21
  $region20: #{dmon_forward.4} parent=0 // pred_region
    _
  $region21: #{dmon_forward.4} parent=0 // pred_fallthru
    _
  // Predicated region
  $region22: #{dmon_forward.4} parent=0 // pred_check
    _
  $region23: #{dmon_forward.4} parent=0 // pred_check_branch
    %25 = sbr.rel (0) target = $region25
  $region24: #{dmon_forward.4} parent=0 // pred_region
    _
  $region25: #{dmon_forward.4} parent=0 // pred_fallthru
    _
  // Predicated region
  $region26: #{dmon_forward.4} parent=0 // pred_check
    _
  $region27: #{dmon_forward.4} parent=0 // pred_check_branch
    %27 = sbr.rel (0) target = $region29
  $region28: #{dmon_forward.4} parent=0 // pred_region
    _
  $region29: #{dmon_forward.4} parent=0 // pred_fallthru
    _
  %p29 = scmp.eq.s32.totalorder 0, 0
  // Predicated region
  $region30: #{dmon_forward.4} parent=0 // pred_check
    %p30 = pneg %p29
  $region31: #{dmon_forward.4} parent=0 // pred_check_branch
    %32 = sbr.rel (%p30) target = $region33
  $region32: #{dmon_forward.4} parent=0 // pred_region
    %vm33 = vcmask 261120
    %34 = vst.msk [vmem:[#allocation2] sm:$0xff] %vm33, 0.0
    %35 = vst.msk [vmem:[#allocation2 + $0x8] sm:$0xff] %vm33, 0.0
    %36 = vst.msk [vmem:[#allocation2 + $0x10] sm:$0xff] %vm33, 0.0
    %37 = vst.msk [vmem:[#allocation2 + $0x18] sm:$0xff] %vm33, 0.0
    %38 = vst.msk [vmem:[#allocation2 + $0x20] sm:$0xff] %vm33, 0.0
    %39 = vst.msk [vmem:[#allocation2 + $0x28] sm:$0xff] %vm33, 0.0
    %40 = vst.msk [vmem:[#allocation2 + $0x30] sm:$0xff] %vm33, 0.0
    %41 = vst.msk [vmem:[#allocation2 + $0x38] sm:$0xff] %vm33, 0.0
    %42 = vst.msk [vmem:[#allocation2 + $0x40] sm:$0xff] %vm33, 0.0
    %43 = vst.msk [vmem:[#allocation2 + $0x48] sm:$0xff] %vm33, 0.0
    %44 = vst.msk [vmem:[#allocation2 + $0x50] sm:$0xff] %vm33, 0.0
    %45 = vst.msk [vmem:[#allocation2 + $0x58] sm:$0xff] %vm33, 0.0
    %46 = vst.msk [vmem:[#allocation2 + $0x60] sm:$0xff] %vm33, 0.0
    %47 = vst.msk [vmem:[#allocation2 + $0x68] sm:$0xff] %vm33, 0.0
    %48 = vst.msk [vmem:[#allocation2 + $0x70] sm:$0xff] %vm33, 0.0
    %49 = vst.msk [vmem:[#allocation2 + $0x78] sm:$0xff] %vm33, 0.0
  $region33: #{dmon_forward.4} parent=0 // pred_fallthru
    _
  %v50 = vld [vmem:[#allocation2] sm:$0xff]
  %v51 = vld [vmem:[#allocation2 + $0x8] sm:$0xff]
  %v52 = vld [vmem:[#allocation2 + $0x10] sm:$0xff]
  %v53 = vld [vmem:[#allocation2 + $0x18] sm:$0xff]
  %v54 = vld [vmem:[#allocation2 + $0x20] sm:$0xff]
  %v55 = vld [vmem:[#allocation2 + $0x28] sm:$0xff]
  %v56 = vld [vmem:[#allocation2 + $0x30] sm:$0xff]
  %v57 = vld [vmem:[#allocation2 + $0x38] sm:$0xff]
  %v58 = vld [vmem:[#allocation2 + $0x40] sm:$0xff]
  %v59 = vld [vmem:[#allocation2 + $0x48] sm:$0xff]
  %v60 = vld [vmem:[#allocation2 + $0x50] sm:$0xff]
  %v61 = vld [vmem:[#allocation2 + $0x58] sm:$0xff]
  %v62 = vld [vmem:[#allocation2 + $0x60] sm:$0xff]
  %v63 = vld [vmem:[#allocation2 + $0x68] sm:$0xff]
  %v64 = vld [vmem:[#allocation2 + $0x70] sm:$0xff]
  %v65 = vld [vmem:[#allocation2 + $0x78] sm:$0xff]
  %v66 = vld [vmem:[%s0] sm:$0xf]
  %v67 = vld [vmem:[%s0 + $0x4] sm:$0xf]
  %v68 = vld [vmem:[%s0 + $0x8] sm:$0xf]
  %v69 = vld [vmem:[%s0 + $0xc] sm:$0xf]
  %v70 = vld [vmem:[%s0 + $0x10] sm:$0xf]
  %v71 = vld [vmem:[%s0 + $0x14] sm:$0xf]
  %v72 = vld [vmem:[%s0 + $0x18] sm:$0xf]
  %v73 = vld [vmem:[%s0 + $0x1c] sm:$0xf]
  %v74 = vld [vmem:[%s0 + $0x20] sm:$0xf]
  %v75 = vld [vmem:[%s0 + $0x24] sm:$0xf]
  %v76 = vld [vmem:[%s0 + $0x28] sm:$0xf]
  %v77 = vld [vmem:[%s0 + $0x2c] sm:$0xf]
  %v78 = vld [vmem:[%s0 + $0x30] sm:$0xf]
  %v79 = vld [vmem:[%s0 + $0x34] sm:$0xf]
  %v80 = vld [vmem:[%s0 + $0x38] sm:$0xf]
  %v81 = vld [vmem:[%s0 + $0x3c] sm:$0xf]
  %v82 = vld [vmem:[%s1] sm:$0xf]
  %v83 = vld [vmem:[%s1 + $0x4] sm:$0xf]
  %v84 = vld [vmem:[%s1 + $0x8] sm:$0xf]
  %v85 = vld [vmem:[%s1 + $0xc] sm:$0xf]
  %v86 = vld [vmem:[%s1 + $0x10] sm:$0xf]
  %v87 = vld [vmem:[%s1 + $0x14] sm:$0xf]
  %v88 = vld [vmem:[%s1 + $0x18] sm:$0xf]
  %v89 = vld [vmem:[%s1 + $0x1c] sm:$0xf]
  %v90 = vld [vmem:[%s1 + $0x20] sm:$0xf]
  %v91 = vld [vmem:[%s1 + $0x24] sm:$0xf]
  %v92 = vld [vmem:[%s1 + $0x28] sm:$0xf]
  %v93 = vld [vmem:[%s1 + $0x2c] sm:$0xf]
  %v94 = vld [vmem:[%s1 + $0x30] sm:$0xf]
  %v95 = vld [vmem:[%s1 + $0x34] sm:$0xf]
  %v96 = vld [vmem:[%s1 + $0x38] sm:$0xf]
  %v97 = vld [vmem:[%s1 + $0x3c] sm:$0xf]
  %v114 = vunpack.c.l.b16 %v66
  %v115 = vunpack.c.l.b16 %v67
  %v116 = vunpack.c.l.b16 %v68
  %v117 = vunpack.c.l.b16 %v69
  %v118 = vunpack.c.l.b16 %v70
  %v119 = vunpack.c.l.b16 %v71
  %v120 = vunpack.c.l.b16 %v72
  %v121 = vunpack.c.l.b16 %v73
  %v122 = vunpack.c.l.b16 %v74
  %v123 = vunpack.c.l.b16 %v75
  %v124 = vunpack.c.l.b16 %v76
  %v125 = vunpack.c.l.b16 %v77
  %v126 = vunpack.c.l.b16 %v78
  %v127 = vunpack.c.l.b16 %v79
  %v128 = vunpack.c.l.b16 %v80
  %v129 = vunpack.c.l.b16 %v81
  %v130 = vpack.c.b16 %v115, %v114
  %v131 = vpack.c.b16 %v117, %v116
  %v132 = vpack.c.b16 %v119, %v118
  %v133 = vpack.c.b16 %v121, %v120
  %v134 = vpack.c.b16 %v123, %v122
  %v135 = vpack.c.b16 %v125, %v124
  %v136 = vpack.c.b16 %v127, %v126
  %v137 = vpack.c.b16 %v129, %v128
  %v162 = vunpack.c.l.b16 %v82
  %v163 = vunpack.c.l.b16 %v83
  %v164 = vunpack.c.l.b16 %v84
  %v165 = vunpack.c.l.b16 %v85
  %v166 = vunpack.c.l.b16 %v86
  %v167 = vunpack.c.l.b16 %v87
  %v168 = vunpack.c.l.b16 %v88
  %v169 = vunpack.c.l.b16 %v89
  %v170 = vunpack.c.l.b16 %v90
  %v171 = vunpack.c.l.b16 %v91
  %v172 = vunpack.c.l.b16 %v92
  %v173 = vunpack.c.l.b16 %v93
  %v174 = vunpack.c.l.b16 %v94
  %v175 = vunpack.c.l.b16 %v95
  %v176 = vunpack.c.l.b16 %v96
  %v177 = vunpack.c.l.b16 %v97
  %v178 = vpack.c.b16 %v163, %v162
  %v179 = vpack.c.b16 %v165, %v164
  %v180 = vpack.c.b16 %v167, %v166
  %v181 = vpack.c.b16 %v169, %v168
  %v182 = vpack.c.b16 %v171, %v170
  %v183 = vpack.c.b16 %v173, %v172
  %v184 = vpack.c.b16 %v175, %v174
  %v185 = vpack.c.b16 %v177, %v176
  %194 = vmatprep.subr.bf16.mxu0 0
  %195 = vmatpush1.bf16.msra.mxu0 %v185
  %196 = vmatprep.subr.bf16.mxu0 0
  %197 = vmatpush1.bf16.msra.mxu0 %v184
  %198 = vmatprep.subr.bf16.mxu0 0
  %199 = vmatpush1.bf16.msra.mxu0 %v183
  %200 = vmatprep.subr.bf16.mxu0 0
  %201 = vmatpush1.bf16.msra.mxu0 %v182
  %202 = vmatprep.subr.bf16.mxu0 0
  %203 = vmatpush1.bf16.msra.mxu0 %v181
  %204 = vmatprep.subr.bf16.mxu0 0
  %205 = vmatpush1.bf16.msra.mxu0 %v180
  %206 = vmatprep.subr.bf16.mxu0 0
  %207 = vmatpush1.bf16.msra.mxu0 %v179
  %208 = vmatprep.subr.bf16.mxu0 0
  %209 = vmatpush1.bf16.msra.mxu0 %v178
  %210 = vmatprep.subr.bf16.mxu0 0
  %211 = vmatpush2.bf16.msra.mxu0 0
  %212 = vmatprep.subr.bf16.mxu0 0
  %213 = vmatpush2.bf16.msra.mxu0 0
  %214 = vmatprep.subr.bf16.mxu0 0
  %215 = vmatpush2.bf16.msra.mxu0 0
  %216 = vmatprep.subr.bf16.mxu0 0
  %217 = vmatpush2.bf16.msra.mxu0 0
  %218 = vmatprep.subr.bf16.mxu0 0
  %219 = vmatpush2.bf16.msra.mxu0 0
  %220 = vmatprep.subr.bf16.mxu0 0
  %221 = vmatpush2.bf16.msra.mxu0 0
  %222 = vmatprep.subr.bf16.mxu0 0
  %223 = vmatpush2.bf16.msra.mxu0 0
  %224 = vmatprep.subr.bf16.mxu0 0
  %225 = vmatpush2.bf16.msra.mxu0 0
  %226 = vmatprep.mubr.bf16.mxu0 0
  %227 = vmatmul.mubr.bf16.gmra.mxu0 %v130
  %v228 = vpop.f32.mrf.mxu0
  %v229 = vadd.f32 0.0, %v228
  %v230 = vpop.f32.mrf.mxu0
  %v231 = vpop.f32.mrf.mxu0
  %v232 = vadd.f32 0.0, %v231
  %v233 = vpop.f32.mrf.mxu0
  %234 = vmatprep.mubr.bf16.mxu0 0
  %235 = vmatmul.mubr.bf16.gmra.mxu0 %v131
  %v236 = vpop.f32.mrf.mxu0
  %v237 = vadd.f32 0.0, %v236
  %v238 = vpop.f32.mrf.mxu0
  %v239 = vpop.f32.mrf.mxu0
  %v240 = vadd.f32 0.0, %v239
  %v241 = vpop.f32.mrf.mxu0
  %242 = vmatprep.mubr.bf16.mxu0 0
  %243 = vmatmul.mubr.bf16.gmra.mxu0 %v132
  %v244 = vpop.f32.mrf.mxu0
  %v245 = vadd.f32 0.0, %v244
  %v246 = vpop.f32.mrf.mxu0
  %v247 = vpop.f32.mrf.mxu0
  %v248 = vadd.f32 0.0, %v247
  %v249 = vpop.f32.mrf.mxu0
  %250 = vmatprep.mubr.bf16.mxu0 0
  %251 = vmatmul.mubr.bf16.gmra.mxu0 %v133
  %v252 = vpop.f32.mrf.mxu0
  %v253 = vadd.f32 0.0, %v252
  %v254 = vpop.f32.mrf.mxu0
  %v255 = vpop.f32.mrf.mxu0
  %v256 = vadd.f32 0.0, %v255
  %v257 = vpop.f32.mrf.mxu0
  %258 = vmatprep.mubr.bf16.mxu0 0
  %259 = vmatmul.mubr.bf16.gmra.mxu0 %v134
  %v260 = vpop.f32.mrf.mxu0
  %v261 = vadd.f32 0.0, %v260
  %v262 = vpop.f32.mrf.mxu0
  %v263 = vpop.f32.mrf.mxu0
  %v264 = vadd.f32 0.0, %v263
  %v265 = vpop.f32.mrf.mxu0
  %266 = vmatprep.mubr.bf16.mxu0 0
  %267 = vmatmul.mubr.bf16.gmra.mxu0 %v135
  %v268 = vpop.f32.mrf.mxu0
  %v269 = vadd.f32 0.0, %v268
  %v270 = vpop.f32.mrf.mxu0
  %v271 = vpop.f32.mrf.mxu0
  %v272 = vadd.f32 0.0, %v271
  %v273 = vpop.f32.mrf.mxu0
  %274 = vmatprep.mubr.bf16.mxu0 0
  %275 = vmatmul.mubr.bf16.gmra.mxu0 %v136
  %v276 = vpop.f32.mrf.mxu0
  %v277 = vadd.f32 0.0, %v276
  %v278 = vpop.f32.mrf.mxu0
  %v279 = vpop.f32.mrf.mxu0
  %v280 = vadd.f32 0.0, %v279
  %v281 = vpop.f32.mrf.mxu0
  %282 = vmatprep.mubr.bf16.mxu0 0
  %283 = vmatmul.mubr.bf16.gmra.mxu0 %v137
  %v284 = vpop.f32.mrf.mxu0
  %v285 = vadd.f32 0.0, %v284
  %v286 = vpop.f32.mrf.mxu0
  %v287 = vpop.f32.mrf.mxu0
  %v288 = vadd.f32 0.0, %v287
  %v289 = vpop.f32.mrf.mxu0
  %290 = vdwg.mxu0
  %v291 = vadd.f32 %v50, %v229
  %v292 = vadd.f32 %v51, %v232
  %v293 = vadd.f32 %v52, %v237
  %v294 = vadd.f32 %v53, %v240
  %v295 = vadd.f32 %v54, %v245
  %v296 = vadd.f32 %v55, %v248
  %v297 = vadd.f32 %v56, %v253
  %v298 = vadd.f32 %v57, %v256
  %v299 = vadd.f32 %v58, %v261
  %v300 = vadd.f32 %v59, %v264
  %v301 = vadd.f32 %v60, %v269
  %v302 = vadd.f32 %v61, %v272
  %v303 = vadd.f32 %v62, %v277
  %v304 = vadd.f32 %v63, %v280
  %v305 = vadd.f32 %v64, %v285
  %v306 = vadd.f32 %v65, %v288
  %vm307 = vcmask 261120
  %308 = vst.msk [vmem:[#allocation2] sm:$0xff] %vm307, %v291
  %309 = vst.msk [vmem:[#allocation2 + $0x8] sm:$0xff] %vm307, %v292
  %310 = vst.msk [vmem:[#allocation2 + $0x10] sm:$0xff] %vm307, %v293
  %311 = vst.msk [vmem:[#allocation2 + $0x18] sm:$0xff] %vm307, %v294
  %312 = vst.msk [vmem:[#allocation2 + $0x20] sm:$0xff] %vm307, %v295
  %313 = vst.msk [vmem:[#allocation2 + $0x28] sm:$0xff] %vm307, %v296
  %314 = vst.msk [vmem:[#allocation2 + $0x30] sm:$0xff] %vm307, %v297
  %315 = vst.msk [vmem:[#allocation2 + $0x38] sm:$0xff] %vm307, %v298
  %316 = vst.msk [vmem:[#allocation2 + $0x40] sm:$0xff] %vm307, %v299
  %317 = vst.msk [vmem:[#allocation2 + $0x48] sm:$0xff] %vm307, %v300
  %318 = vst.msk [vmem:[#allocation2 + $0x50] sm:$0xff] %vm307, %v301
  %319 = vst.msk [vmem:[#allocation2 + $0x58] sm:$0xff] %vm307, %v302
  %320 = vst.msk [vmem:[#allocation2 + $0x60] sm:$0xff] %vm307, %v303
  %321 = vst.msk [vmem:[#allocation2 + $0x68] sm:$0xff] %vm307, %v304
  %322 = vst.msk [vmem:[#allocation2 + $0x70] sm:$0xff] %vm307, %v305
  %323 = vst.msk [vmem:[#allocation2 + $0x78] sm:$0xff] %vm307, %v306
  // Predicated region
  $region34: #{dmon_forward.4} parent=0 // pred_check
    %p324 = pneg %p29
  $region35: #{dmon_forward.4} parent=0 // pred_check_branch
    %326 = sbr.rel (%p324) target = $region37
  $region36: #{dmon_forward.4} parent=0 // pred_region
    %v327 = vld [vmem:[#allocation2] sm:$0xff]
    %v328 = vld [vmem:[#allocation2 + $0x8] sm:$0xff]
    %v329 = vld [vmem:[#allocation2 + $0x10] sm:$0xff]
    %v330 = vld [vmem:[#allocation2 + $0x18] sm:$0xff]
    %v331 = vld [vmem:[#allocation2 + $0x20] sm:$0xff]
    %v332 = vld [vmem:[#allocation2 + $0x28] sm:$0xff]
    %v333 = vld [vmem:[#allocation2 + $0x30] sm:$0xff]
    %v334 = vld [vmem:[#allocation2 + $0x38] sm:$0xff]
    %v335 = vld [vmem:[#allocation2 + $0x40] sm:$0xff]
    %v336 = vld [vmem:[#allocation2 + $0x48] sm:$0xff]
    %v337 = vld [vmem:[#allocation2 + $0x50] sm:$0xff]
    %v338 = vld [vmem:[#allocation2 + $0x58] sm:$0xff]
    %v339 = vld [vmem:[#allocation2 + $0x60] sm:$0xff]
    %v340 = vld [vmem:[#allocation2 + $0x68] sm:$0xff]
    %v341 = vld [vmem:[#allocation2 + $0x70] sm:$0xff]
    %v342 = vld [vmem:[#allocation2 + $0x78] sm:$0xff]
    %v343 = vld [vmem:[%s2] sm:$0xff]
    %v344 = vld [vmem:[%s2 + $0x8] sm:$0xff]
    %v345 = vld [vmem:[%s2 + $0x10] sm:$0xff]
    %v346 = vld [vmem:[%s2 + $0x18] sm:$0xff]
    %v347 = vld [vmem:[%s3] sm:$0x1]
    %v349 = vlaneseq
    %v350 = vshrl.u32 %v349, 7
    %v351 = vsub.s32 0, %v350
    %v352 = vrot.slane %v347, %v351
    %v355 = vsel %vm307, %v327, 0
    %v358 = vsel %vm307, %v328, 0
    %v361 = vsel %vm307, %v329, 0
    %v364 = vsel %vm307, %v330, 0
    %v367 = vsel %vm307, %v331, 0
    %v370 = vsel %vm307, %v332, 0
    %v373 = vsel %vm307, %v333, 0
    %v376 = vsel %vm307, %v334, 0
    %v379 = vsel %vm307, %v335, 0
    %v382 = vsel %vm307, %v336, 0
    %v385 = vsel %vm307, %v337, 0
    %v388 = vsel %vm307, %v338, 0
    %v391 = vsel %vm307, %v339, 0
    %v394 = vsel %vm307, %v340, 0
    %v397 = vsel %vm307, %v341, 0
    %v400 = vsel %vm307, %v342, 0
    %402 = vmatprep.subr.mxu0 0.0
    %403 = vmatpush1.msra.mxu0 0.0
    %404 = vmatprep.subr.mxu0 0.0
    %405 = vmatpush1.msra.mxu0 0.0
    %406 = vmatprep.subr.mxu0 0.0
    %407 = vmatpush1.msra.mxu0 0.0
    %408 = vmatprep.subr.mxu0 0.0
    %409 = vmatpush1.msra.mxu0 0.0
    %410 = vmatprep.subr.mxu0 0.0
    %411 = vmatpush1.msra.mxu0 0.0
    %412 = vmatprep.subr.mxu0 0.0
    %413 = vmatpush1.msra.mxu0 0.0
    %414 = vmatprep.subr.mxu0 0.0
    %415 = vmatpush1.msra.mxu0 0.0
    %416 = vmatprep.subr.mxu0 0.0
    %417 = vmatpush1.msra.mxu0 0.0
    %418 = vmatprep.subr.mxu0 0.0
    %419 = vmatpush1.msra.mxu0 0.0
    %420 = vmatprep.subr.mxu0 0.0
    %421 = vmatpush1.msra.mxu0 0.0
    %422 = vmatprep.subr.mxu0 0.0
    %423 = vmatpush1.msra.mxu0 0.0
    %424 = vmatprep.subr.mxu0 0.0
    %425 = vmatpush1.msra.mxu0 0.0
    %426 = vmatprep.subr.mxu0 0.0
    %427 = vmatpush1.msra.mxu0 %v346
    %428 = vmatprep.subr.mxu0 0.0
    %429 = vmatpush1.msra.mxu0 %v345
    %430 = vmatprep.subr.mxu0 0.0
    %431 = vmatpush1.msra.mxu0 %v344
    %432 = vmatprep.subr.mxu0 0.0
    %433 = vmatpush1.msra.mxu0 %v343
    %434 = vmatprep.subr.mxu0 0.0
    %435 = vmatpush2.msra.mxu0 0.0
    %436 = vmatprep.subr.mxu0 0.0
    %437 = vmatpush2.msra.mxu0 0.0
    %438 = vmatprep.subr.mxu0 0.0
    %439 = vmatpush2.msra.mxu0 0.0
    %440 = vmatprep.subr.mxu0 0.0
    %441 = vmatpush2.msra.mxu0 0.0
    %442 = vmatprep.subr.mxu0 0.0
    %443 = vmatpush2.msra.mxu0 0.0
    %444 = vmatprep.subr.mxu0 0.0
    %445 = vmatpush2.msra.mxu0 0.0
    %446 = vmatprep.subr.mxu0 0.0
    %447 = vmatpush2.msra.mxu0 0.0
    %448 = vmatprep.subr.mxu0 0.0
    %449 = vmatpush2.msra.mxu0 0.0
    %450 = vmatprep.subr.mxu0 0.0
    %451 = vmatpush2.msra.mxu0 0.0
    %452 = vmatprep.subr.mxu0 0.0
    %453 = vmatpush2.msra.mxu0 0.0
    %454 = vmatprep.subr.mxu0 0.0
    %455 = vmatpush2.msra.mxu0 0.0
    %456 = vmatprep.subr.mxu0 0.0
    %457 = vmatpush2.msra.mxu0 0.0
    %458 = vmatprep.subr.mxu0 0.0
    %459 = vmatpush2.msra.mxu0 0.0
    %460 = vmatprep.subr.mxu0 0.0
    %461 = vmatpush2.msra.mxu0 0.0
    %462 = vmatprep.subr.mxu0 0.0
    %463 = vmatpush2.msra.mxu0 0.0
    %464 = vmatprep.subr.mxu0 0.0
    %465 = vmatpush2.msra.mxu0 0.0
    %466 = vmatprep.mubr.f32.mxu0 0.0
    %467 = vmatmul.mubr.f32.gmra.mxu0 %v355
    %v468 = vpop.f32.mrf.mxu0
    %v469 = vadd.f32 %v352, %v468
    %v470 = vpop.f32.mrf.mxu0
    %471 = vmatprep.mubr.f32.mxu0 0.0
    %472 = vmatmul.mubr.f32.gmra.mxu0 %v358
    %v473 = vpop.f32.mrf.mxu0
    %v474 = vadd.f32 %v352, %v473
    %v475 = vpop.f32.mrf.mxu0
    %476 = vmatprep.mubr.f32.mxu0 0.0
    %477 = vmatmul.mubr.f32.gmra.mxu0 %v361
    %v478 = vpop.f32.mrf.mxu0
    %v479 = vadd.f32 %v352, %v478
    %v480 = vpop.f32.mrf.mxu0
    %481 = vmatprep.mubr.f32.mxu0 0.0
    %482 = vmatmul.mubr.f32.gmra.mxu0 %v364
    %v483 = vpop.f32.mrf.mxu0
    %v484 = vadd.f32 %v352, %v483
    %v485 = vpop.f32.mrf.mxu0
    %486 = vmatprep.mubr.f32.mxu0 0.0
    %487 = vmatmul.mubr.f32.gmra.mxu0 %v367
    %v488 = vpop.f32.mrf.mxu0
    %v489 = vadd.f32 %v352, %v488
    %v490 = vpop.f32.mrf.mxu0
    %491 = vmatprep.mubr.f32.mxu0 0.0
    %492 = vmatmul.mubr.f32.gmra.mxu0 %v370
    %v493 = vpop.f32.mrf.mxu0
    %v494 = vadd.f32 %v352, %v493
    %v495 = vpop.f32.mrf.mxu0
    %496 = vmatprep.mubr.f32.mxu0 0.0
    %497 = vmatmul.mubr.f32.gmra.mxu0 %v373
    %v498 = vpop.f32.mrf.mxu0
    %v499 = vadd.f32 %v352, %v498
    %v500 = vpop.f32.mrf.mxu0
    %501 = vmatprep.mubr.f32.mxu0 0.0
    %502 = vmatmul.mubr.f32.gmra.mxu0 %v376
    %v503 = vpop.f32.mrf.mxu0
    %v504 = vadd.f32 %v352, %v503
    %v505 = vpop.f32.mrf.mxu0
    %506 = vmatprep.mubr.f32.mxu0 0.0
    %507 = vmatmul.mubr.f32.gmra.mxu0 %v379
    %v508 = vpop.f32.mrf.mxu0
    %v509 = vadd.f32 %v352, %v508
    %v510 = vpop.f32.mrf.mxu0
    %511 = vmatprep.mubr.f32.mxu0 0.0
    %512 = vmatmul.mubr.f32.gmra.mxu0 %v382
    %v513 = vpop.f32.mrf.mxu0
    %v514 = vadd.f32 %v352, %v513
    %v515 = vpop.f32.mrf.mxu0
    %516 = vmatprep.mubr.f32.mxu0 0.0
    %517 = vmatmul.mubr.f32.gmra.mxu0 %v385
    %v518 = vpop.f32.mrf.mxu0
    %v519 = vadd.f32 %v352, %v518
    %v520 = vpop.f32.mrf.mxu0
    %521 = vmatprep.mubr.f32.mxu0 0.0
    %522 = vmatmul.mubr.f32.gmra.mxu0 %v388
    %v523 = vpop.f32.mrf.mxu0
    %v524 = vadd.f32 %v352, %v523
    %v525 = vpop.f32.mrf.mxu0
    %526 = vmatprep.mubr.f32.mxu0 0.0
    %527 = vmatmul.mubr.f32.gmra.mxu0 %v391
    %v528 = vpop.f32.mrf.mxu0
    %v529 = vadd.f32 %v352, %v528
    %v530 = vpop.f32.mrf.mxu0
    %531 = vmatprep.mubr.f32.mxu0 0.0
    %532 = vmatmul.mubr.f32.gmra.mxu0 %v394
    %v533 = vpop.f32.mrf.mxu0
    %v534 = vadd.f32 %v352, %v533
    %v535 = vpop.f32.mrf.mxu0
    %536 = vmatprep.mubr.f32.mxu0 0.0
    %537 = vmatmul.mubr.f32.gmra.mxu0 %v397
    %v538 = vpop.f32.mrf.mxu0
    %v539 = vadd.f32 %v352, %v538
    %v540 = vpop.f32.mrf.mxu0
    %541 = vmatprep.mubr.f32.mxu0 0.0
    %542 = vmatmul.mubr.f32.gmra.mxu0 %v400
    %v543 = vpop.f32.mrf.mxu0
    %v544 = vadd.f32 %v352, %v543
    %v545 = vpop.f32.mrf.mxu0
    %546 = vdwg.mxu0
    %v547 = vmax.f32 %v469, 0.0
    %v548 = vmax.f32 %v474, 0.0
    %v549 = vmax.f32 %v479, 0.0
    %v550 = vmax.f32 %v484, 0.0
    %v551 = vmax.f32 %v489, 0.0
    %v552 = vmax.f32 %v494, 0.0
    %v553 = vmax.f32 %v499, 0.0
    %v554 = vmax.f32 %v504, 0.0
    %v555 = vmax.f32 %v509, 0.0
    %v556 = vmax.f32 %v514, 0.0
    %v557 = vmax.f32 %v519, 0.0
    %v558 = vmax.f32 %v524, 0.0
    %v559 = vmax.f32 %v529, 0.0
    %v560 = vmax.f32 %v534, 0.0
    %v561 = vmax.f32 %v539, 0.0
    %v562 = vmax.f32 %v544, 0.0
    %v563 = vld [vmem:[%s4] sm:$0xff]
    %v564 = vld [vmem:[%s4 + $0x8] sm:$0xff]
    %v565 = vld [vmem:[%s4 + $0x10] sm:$0xff]
    %v566 = vld [vmem:[%s4 + $0x18] sm:$0xff]
    %v567 = vld [vmem:[%s5] sm:$0x1]
    %v569 = vlaneseq
    %v570 = vshrl.u32 %v569, 7
    %v571 = vsub.s32 0, %v570
    %v572 = vrot.slane %v567, %v571
    %v575 = vsel %vm307, %v547, 0
    %v578 = vsel %vm307, %v548, 0
    %v581 = vsel %vm307, %v549, 0
    %v584 = vsel %vm307, %v550, 0
    %v587 = vsel %vm307, %v551, 0
    %v590 = vsel %vm307, %v552, 0
    %v593 = vsel %vm307, %v553, 0
    %v596 = vsel %vm307, %v554, 0
    %v599 = vsel %vm307, %v555, 0
    %v602 = vsel %vm307, %v556, 0
    %v605 = vsel %vm307, %v557, 0
    %v608 = vsel %vm307, %v558, 0
    %v611 = vsel %vm307, %v559, 0
    %v614 = vsel %vm307, %v560, 0
    %v617 = vsel %vm307, %v561, 0
    %v620 = vsel %vm307, %v562, 0
    %622 = vmatprep.subr.mxu0 0.0
    %623 = vmatpush1.msra.mxu0 0.0
    %624 = vmatprep.subr.mxu0 0.0
    %625 = vmatpush1.msra.mxu0 0.0
    %626 = vmatprep.subr.mxu0 0.0
    %627 = vmatpush1.msra.mxu0 0.0
    %628 = vmatprep.subr.mxu0 0.0
    %629 = vmatpush1.msra.mxu0 0.0
    %630 = vmatprep.subr.mxu0 0.0
    %631 = vmatpush1.msra.mxu0 0.0
    %632 = vmatprep.subr.mxu0 0.0
    %633 = vmatpush1.msra.mxu0 0.0
    %634 = vmatprep.subr.mxu0 0.0
    %635 = vmatpush1.msra.mxu0 0.0
    %636 = vmatprep.subr.mxu0 0.0
    %637 = vmatpush1.msra.mxu0 0.0
    %638 = vmatprep.subr.mxu0 0.0
    %639 = vmatpush1.msra.mxu0 0.0
    %640 = vmatprep.subr.mxu0 0.0
    %641 = vmatpush1.msra.mxu0 0.0
    %642 = vmatprep.subr.mxu0 0.0
    %643 = vmatpush1.msra.mxu0 0.0
    %644 = vmatprep.subr.mxu0 0.0
    %645 = vmatpush1.msra.mxu0 0.0
    %646 = vmatprep.subr.mxu0 0.0
    %647 = vmatpush1.msra.mxu0 %v566
    %648 = vmatprep.subr.mxu0 0.0
    %649 = vmatpush1.msra.mxu0 %v565
    %650 = vmatprep.subr.mxu0 0.0
    %651 = vmatpush1.msra.mxu0 %v564
    %652 = vmatprep.subr.mxu0 0.0
    %653 = vmatpush1.msra.mxu0 %v563
    %654 = vmatprep.subr.mxu0 0.0
    %655 = vmatpush2.msra.mxu0 0.0
    %656 = vmatprep.subr.mxu0 0.0
    %657 = vmatpush2.msra.mxu0 0.0
    %658 = vmatprep.subr.mxu0 0.0
    %659 = vmatpush2.msra.mxu0 0.0
    %660 = vmatprep.subr.mxu0 0.0
    %661 = vmatpush2.msra.mxu0 0.0
    %662 = vmatprep.subr.mxu0 0.0
    %663 = vmatpush2.msra.mxu0 0.0
    %664 = vmatprep.subr.mxu0 0.0
    %665 = vmatpush2.msra.mxu0 0.0
    %666 = vmatprep.subr.mxu0 0.0
    %667 = vmatpush2.msra.mxu0 0.0
    %668 = vmatprep.subr.mxu0 0.0
    %669 = vmatpush2.msra.mxu0 0.0
    %670 = vmatprep.subr.mxu0 0.0
    %671 = vmatpush2.msra.mxu0 0.0
    %672 = vmatprep.subr.mxu0 0.0
    %673 = vmatpush2.msra.mxu0 0.0
    %674 = vmatprep.subr.mxu0 0.0
    %675 = vmatpush2.msra.mxu0 0.0
    %676 = vmatprep.subr.mxu0 0.0
    %677 = vmatpush2.msra.mxu0 0.0
    %678 = vmatprep.subr.mxu0 0.0
    %679 = vmatpush2.msra.mxu0 0.0
    %680 = vmatprep.subr.mxu0 0.0
    %681 = vmatpush2.msra.mxu0 0.0
    %682 = vmatprep.subr.mxu0 0.0
    %683 = vmatpush2.msra.mxu0 0.0
    %684 = vmatprep.subr.mxu0 0.0
    %685 = vmatpush2.msra.mxu0 0.0
    %686 = vmatprep.mubr.f32.mxu0 0.0
    %687 = vmatmul.mubr.f32.gmra.mxu0 %v575
    %v688 = vpop.f32.mrf.mxu0
    %v689 = vadd.f32 %v572, %v688
    %v690 = vpop.f32.mrf.mxu0
    %691 = vmatprep.mubr.f32.mxu0 0.0
    %692 = vmatmul.mubr.f32.gmra.mxu0 %v578
    %v693 = vpop.f32.mrf.mxu0
    %v694 = vadd.f32 %v572, %v693
    %v695 = vpop.f32.mrf.mxu0
    %696 = vmatprep.mubr.f32.mxu0 0.0
    %697 = vmatmul.mubr.f32.gmra.mxu0 %v581
    %v698 = vpop.f32.mrf.mxu0
    %v699 = vadd.f32 %v572, %v698
    %v700 = vpop.f32.mrf.mxu0
    %701 = vmatprep.mubr.f32.mxu0 0.0
    %702 = vmatmul.mubr.f32.gmra.mxu0 %v584
    %v703 = vpop.f32.mrf.mxu0
    %v704 = vadd.f32 %v572, %v703
    %v705 = vpop.f32.mrf.mxu0
    %706 = vmatprep.mubr.f32.mxu0 0.0
    %707 = vmatmul.mubr.f32.gmra.mxu0 %v587
    %v708 = vpop.f32.mrf.mxu0
    %v709 = vadd.f32 %v572, %v708
    %v710 = vpop.f32.mrf.mxu0
    %711 = vmatprep.mubr.f32.mxu0 0.0
    %712 = vmatmul.mubr.f32.gmra.mxu0 %v590
    %v713 = vpop.f32.mrf.mxu0
    %v714 = vadd.f32 %v572, %v713
    %v715 = vpop.f32.mrf.mxu0
    %716 = vmatprep.mubr.f32.mxu0 0.0
    %717 = vmatmul.mubr.f32.gmra.mxu0 %v593
    %v718 = vpop.f32.mrf.mxu0
    %v719 = vadd.f32 %v572, %v718
    %v720 = vpop.f32.mrf.mxu0
    %721 = vmatprep.mubr.f32.mxu0 0.0
    %722 = vmatmul.mubr.f32.gmra.mxu0 %v596
    %v723 = vpop.f32.mrf.mxu0
    %v724 = vadd.f32 %v572, %v723
    %v725 = vpop.f32.mrf.mxu0
    %726 = vmatprep.mubr.f32.mxu0 0.0
    %727 = vmatmul.mubr.f32.gmra.mxu0 %v599
    %v728 = vpop.f32.mrf.mxu0
    %v729 = vadd.f32 %v572, %v728
    %v730 = vpop.f32.mrf.mxu0
    %731 = vmatprep.mubr.f32.mxu0 0.0
    %732 = vmatmul.mubr.f32.gmra.mxu0 %v602
    %v733 = vpop.f32.mrf.mxu0
    %v734 = vadd.f32 %v572, %v733
    %v735 = vpop.f32.mrf.mxu0
    %736 = vmatprep.mubr.f32.mxu0 0.0
    %737 = vmatmul.mubr.f32.gmra.mxu0 %v605
    %v738 = vpop.f32.mrf.mxu0
    %v739 = vadd.f32 %v572, %v738
    %v740 = vpop.f32.mrf.mxu0
    %741 = vmatprep.mubr.f32.mxu0 0.0
    %742 = vmatmul.mubr.f32.gmra.mxu0 %v608
    %v743 = vpop.f32.mrf.mxu0
    %v744 = vadd.f32 %v572, %v743
    %v745 = vpop.f32.mrf.mxu0
    %746 = vmatprep.mubr.f32.mxu0 0.0
    %747 = vmatmul.mubr.f32.gmra.mxu0 %v611
    %v748 = vpop.f32.mrf.mxu0
    %v749 = vadd.f32 %v572, %v748
    %v750 = vpop.f32.mrf.mxu0
    %751 = vmatprep.mubr.f32.mxu0 0.0
    %752 = vmatmul.mubr.f32.gmra.mxu0 %v614
    %v753 = vpop.f32.mrf.mxu0
    %v754 = vadd.f32 %v572, %v753
    %v755 = vpop.f32.mrf.mxu0
    %756 = vmatprep.mubr.f32.mxu0 0.0
    %757 = vmatmul.mubr.f32.gmra.mxu0 %v617
    %v758 = vpop.f32.mrf.mxu0
    %v759 = vadd.f32 %v572, %v758
    %v760 = vpop.f32.mrf.mxu0
    %761 = vmatprep.mubr.f32.mxu0 0.0
    %762 = vmatmul.mubr.f32.gmra.mxu0 %v620
    %v763 = vpop.f32.mrf.mxu0
    %v764 = vadd.f32 %v572, %v763
    %v765 = vpop.f32.mrf.mxu0
    %766 = vdwg.mxu0
    %vm767 = vcmask 31744
    %v768 = vsel %vm767, %v689, -inf
    %769 = vmax.xlane.f32.xlu0 %v768
    %v770 = vpop.xlane.xlu0 %769
    %v771 = vsel %vm767, %v694, -inf
    %772 = vmax.xlane.f32.xlu0 %v771
    %v773 = vpop.xlane.xlu0 %772
    %v774 = vsel %vm767, %v699, -inf
    %775 = vmax.xlane.f32.xlu0 %v774
    %v776 = vpop.xlane.xlu0 %775
    %v777 = vsel %vm767, %v704, -inf
    %778 = vmax.xlane.f32.xlu0 %v777
    %v779 = vpop.xlane.xlu0 %778
    %v780 = vsel %vm767, %v709, -inf
    %781 = vmax.xlane.f32.xlu0 %v780
    %v782 = vpop.xlane.xlu0 %781
    %v783 = vsel %vm767, %v714, -inf
    %784 = vmax.xlane.f32.xlu0 %v783
    %v785 = vpop.xlane.xlu0 %784
    %v786 = vsel %vm767, %v719, -inf
    %787 = vmax.xlane.f32.xlu0 %v786
    %v788 = vpop.xlane.xlu0 %787
    %v789 = vsel %vm767, %v724, -inf
    %790 = vmax.xlane.f32.xlu0 %v789
    %v791 = vpop.xlane.xlu0 %790
    %v792 = vsel %vm767, %v729, -inf
    %793 = vmax.xlane.f32.xlu0 %v792
    %v794 = vpop.xlane.xlu0 %793
    %v795 = vsel %vm767, %v734, -inf
    %796 = vmax.xlane.f32.xlu0 %v795
    %v797 = vpop.xlane.xlu0 %796
    %v798 = vsel %vm767, %v739, -inf
    %799 = vmax.xlane.f32.xlu0 %v798
    %v800 = vpop.xlane.xlu0 %799
    %v801 = vsel %vm767, %v744, -inf
    %802 = vmax.xlane.f32.xlu0 %v801
    %v803 = vpop.xlane.xlu0 %802
    %v804 = vsel %vm767, %v749, -inf
    %805 = vmax.xlane.f32.xlu0 %v804
    %v806 = vpop.xlane.xlu0 %805
    %v807 = vsel %vm767, %v754, -inf
    %808 = vmax.xlane.f32.xlu0 %v807
    %v809 = vpop.xlane.xlu0 %808
    %v810 = vsel %vm767, %v759, -inf
    %811 = vmax.xlane.f32.xlu0 %v810
    %v812 = vpop.xlane.xlu0 %811
    %v813 = vsel %vm767, %v764, -inf
    %814 = vmax.xlane.f32.xlu0 %v813
    %v815 = vpop.xlane.xlu0 %814
    %v816 = vsub.f32 %v689, %v770
    %v817 = vsub.f32 %v694, %v773
    %v818 = vsub.f32 %v699, %v776
    %v819 = vsub.f32 %v704, %v779
    %v820 = vsub.f32 %v709, %v782
    %v821 = vsub.f32 %v714, %v785
    %v822 = vsub.f32 %v719, %v788
    %v823 = vsub.f32 %v724, %v791
    %v824 = vsub.f32 %v729, %v794
    %v825 = vsub.f32 %v734, %v797
    %v826 = vsub.f32 %v739, %v800
    %v827 = vsub.f32 %v744, %v803
    %v828 = vsub.f32 %v749, %v806
    %v829 = vsub.f32 %v754, %v809
    %v830 = vsub.f32 %v759, %v812
    %v831 = vsub.f32 %v764, %v815
    %v832 = vmul.f32 %v816, 1.442695
    %v833 = vpow.pop %v832
    %v834 = vmul.f32 %v817, 1.442695
    %v835 = vpow.pop %v834
    %v836 = vmul.f32 %v818, 1.442695
    %v837 = vpow.pop %v836
    %v838 = vmul.f32 %v819, 1.442695
    %v839 = vpow.pop %v838
    %v840 = vmul.f32 %v820, 1.442695
    %v841 = vpow.pop %v840
    %v842 = vmul.f32 %v821, 1.442695
    %v843 = vpow.pop %v842
    %v844 = vmul.f32 %v822, 1.442695
    %v845 = vpow.pop %v844
    %v846 = vmul.f32 %v823, 1.442695
    %v847 = vpow.pop %v846
    %v848 = vmul.f32 %v824, 1.442695
    %v849 = vpow.pop %v848
    %v850 = vmul.f32 %v825, 1.442695
    %v851 = vpow.pop %v850
    %v852 = vmul.f32 %v826, 1.442695
    %v853 = vpow.pop %v852
    %v854 = vmul.f32 %v827, 1.442695
    %v855 = vpow.pop %v854
    %v856 = vmul.f32 %v828, 1.442695
    %v857 = vpow.pop %v856
    %v858 = vmul.f32 %v829, 1.442695
    %v859 = vpow.pop %v858
    %v860 = vmul.f32 %v830, 1.442695
    %v861 = vpow.pop %v860
    %v862 = vmul.f32 %v831, 1.442695
    %v863 = vpow.pop %v862
    %v864 = vsel %vm767, %v833, 0.0
    %865 = vadd.xlane.f32.xlu0 %v864
    %v866 = vpop.xlane.xlu0 %865
    %v867 = vsel %vm767, %v835, 0.0
    %868 = vadd.xlane.f32.xlu0 %v867
    %v869 = vpop.xlane.xlu0 %868
    %v870 = vsel %vm767, %v837, 0.0
    %871 = vadd.xlane.f32.xlu0 %v870
    %v872 = vpop.xlane.xlu0 %871
    %v873 = vsel %vm767, %v839, 0.0
    %874 = vadd.xlane.f32.xlu0 %v873
    %v875 = vpop.xlane.xlu0 %874
    %v876 = vsel %vm767, %v841, 0.0
    %877 = vadd.xlane.f32.xlu0 %v876
    %v878 = vpop.xlane.xlu0 %877
    %v879 = vsel %vm767, %v843, 0.0
    %880 = vadd.xlane.f32.xlu0 %v879
    %v881 = vpop.xlane.xlu0 %880
    %v882 = vsel %vm767, %v845, 0.0
    %883 = vadd.xlane.f32.xlu0 %v882
    %v884 = vpop.xlane.xlu0 %883
    %v885 = vsel %vm767, %v847, 0.0
    %886 = vadd.xlane.f32.xlu0 %v885
    %v887 = vpop.xlane.xlu0 %886
    %v888 = vsel %vm767, %v849, 0.0
    %889 = vadd.xlane.f32.xlu0 %v888
    %v890 = vpop.xlane.xlu0 %889
    %v891 = vsel %vm767, %v851, 0.0
    %892 = vadd.xlane.f32.xlu0 %v891
    %v893 = vpop.xlane.xlu0 %892
    %v894 = vsel %vm767, %v853, 0.0
    %895 = vadd.xlane.f32.xlu0 %v894
    %v896 = vpop.xlane.xlu0 %895
    %v897 = vsel %vm767, %v855, 0.0
    %898 = vadd.xlane.f32.xlu0 %v897
    %v899 = vpop.xlane.xlu0 %898
    %v900 = vsel %vm767, %v857, 0.0
    %901 = vadd.xlane.f32.xlu0 %v900
    %v902 = vpop.xlane.xlu0 %901
    %v903 = vsel %vm767, %v859, 0.0
    %904 = vadd.xlane.f32.xlu0 %v903
    %v905 = vpop.xlane.xlu0 %904
    %v906 = vsel %vm767, %v861, 0.0
    %907 = vadd.xlane.f32.xlu0 %v906
    %v908 = vpop.xlane.xlu0 %907
    %v909 = vsel %vm767, %v863, 0.0
    %910 = vadd.xlane.f32.xlu0 %v909
    %v911 = vpop.xlane.xlu0 %910
    %v912 = vrcp.pop %v866
    %v913 = vmul.f32 %v833, %v912
    %v914 = vrcp.pop %v869
    %v915 = vmul.f32 %v835, %v914
    %v916 = vrcp.pop %v872
    %v917 = vmul.f32 %v837, %v916
    %v918 = vrcp.pop %v875
    %v919 = vmul.f32 %v839, %v918
    %v920 = vrcp.pop %v878
    %v921 = vmul.f32 %v841, %v920
    %v922 = vrcp.pop %v881
    %v923 = vmul.f32 %v843, %v922
    %v924 = vrcp.pop %v884
    %v925 = vmul.f32 %v845, %v924
    %v926 = vrcp.pop %v887
    %v927 = vmul.f32 %v847, %v926
    %v928 = vrcp.pop %v890
    %v929 = vmul.f32 %v849, %v928
    %v930 = vrcp.pop %v893
    %v931 = vmul.f32 %v851, %v930
    %v932 = vrcp.pop %v896
    %v933 = vmul.f32 %v853, %v932
    %v934 = vrcp.pop %v899
    %v935 = vmul.f32 %v855, %v934
    %v936 = vrcp.pop %v902
    %v937 = vmul.f32 %v857, %v936
    %v938 = vrcp.pop %v905
    %v939 = vmul.f32 %v859, %v938
    %v940 = vrcp.pop %v908
    %v941 = vmul.f32 %v861, %v940
    %v942 = vrcp.pop %v911
    %v943 = vmul.f32 %v863, %v942
    %v944 = vld [vmem:[%s6] sm:$0xff]
    %v945 = vld [vmem:[%s6 + $0x8] sm:$0xff]
    %v946 = vld [vmem:[%s6 + $0x10] sm:$0xff]
    %v947 = vld [vmem:[%s6 + $0x18] sm:$0xff]
    %v948 = vld [vmem:[%s6 + $0x20] sm:$0xff]
    %v949 = vld [vmem:[%s6 + $0x28] sm:$0xff]
    %v950 = vld [vmem:[%s6 + $0x30] sm:$0xff]
    %v951 = vld [vmem:[%s6 + $0x38] sm:$0xff]
    %v952 = vld [vmem:[%s6 + $0x40] sm:$0xff]
    %v953 = vld [vmem:[%s6 + $0x48] sm:$0xff]
    %v954 = vld [vmem:[%s6 + $0x50] sm:$0xff]
    %v955 = vld [vmem:[%s6 + $0x58] sm:$0xff]
    %v956 = vld [vmem:[%s6 + $0x60] sm:$0xff]
    %v957 = vld [vmem:[%s6 + $0x68] sm:$0xff]
    %v958 = vld [vmem:[%s6 + $0x70] sm:$0xff]
    %v959 = vld [vmem:[%s6 + $0x78] sm:$0xff]
    %961 = vset.pattern.permute.xlu0 0
    %962 = vperm.xlu0 %961, %v944
    %v963 = vpop.permute.xlu0 %962
    %966 = vset.pattern.permute.xlu0 0
    %967 = vperm.xlu0 %966, %v945
    %v968 = vpop.permute.xlu0 %967
    %971 = vset.pattern.permute.xlu0 0
    %972 = vperm.xlu0 %971, %v946
    %v973 = vpop.permute.xlu0 %972
    %976 = vset.pattern.permute.xlu0 0
    %977 = vperm.xlu0 %976, %v947
    %v978 = vpop.permute.xlu0 %977
    %981 = vset.pattern.permute.xlu0 0
    %982 = vperm.xlu0 %981, %v948
    %v983 = vpop.permute.xlu0 %982
    %986 = vset.pattern.permute.xlu0 0
    %987 = vperm.xlu0 %986, %v949
    %v988 = vpop.permute.xlu0 %987
    %991 = vset.pattern.permute.xlu0 0
    %992 = vperm.xlu0 %991, %v950
    %v993 = vpop.permute.xlu0 %992
    %996 = vset.pattern.permute.xlu0 0
    %997 = vperm.xlu0 %996, %v951
    %v998 = vpop.permute.xlu0 %997
    %1001 = vset.pattern.permute.xlu0 0
    %1002 = vperm.xlu0 %1001, %v952
    %v1003 = vpop.permute.xlu0 %1002
    %1006 = vset.pattern.permute.xlu0 0
    %1007 = vperm.xlu0 %1006, %v953
    %v1008 = vpop.permute.xlu0 %1007
    %1011 = vset.pattern.permute.xlu0 0
    %1012 = vperm.xlu0 %1011, %v954
    %v1013 = vpop.permute.xlu0 %1012
    %1016 = vset.pattern.permute.xlu0 0
    %1017 = vperm.xlu0 %1016, %v955
    %v1018 = vpop.permute.xlu0 %1017
    %1021 = vset.pattern.permute.xlu0 0
    %1022 = vperm.xlu0 %1021, %v956
    %v1023 = vpop.permute.xlu0 %1022
    %1026 = vset.pattern.permute.xlu0 0
    %1027 = vperm.xlu0 %1026, %v957
    %v1028 = vpop.permute.xlu0 %1027
    %1031 = vset.pattern.permute.xlu0 0
    %1032 = vperm.xlu0 %1031, %v958
    %v1033 = vpop.permute.xlu0 %1032
    %1036 = vset.pattern.permute.xlu0 0
    %1037 = vperm.xlu0 %1036, %v959
    %v1038 = vpop.permute.xlu0 %1037
    %v1040 = vmul.f32 %v913, %v963
    %v1041 = vmul.f32 %v915, %v968
    %v1042 = vmul.f32 %v917, %v973
    %v1043 = vmul.f32 %v919, %v978
    %v1044 = vmul.f32 %v921, %v983
    %v1045 = vmul.f32 %v923, %v988
    %v1046 = vmul.f32 %v925, %v993
    %v1047 = vmul.f32 %v927, %v998
    %v1048 = vmul.f32 %v929, %v1003
    %v1049 = vmul.f32 %v931, %v1008
    %v1050 = vmul.f32 %v933, %v1013
    %v1051 = vmul.f32 %v935, %v1018
    %v1052 = vmul.f32 %v937, %v1023
    %v1053 = vmul.f32 %v939, %v1028
    %v1054 = vmul.f32 %v941, %v1033
    %v1055 = vmul.f32 %v943, %v1038
    %1056 = vst.msk [vmem:[%s7] sm:$0xff] %vm767, %v1040
    %1057 = vst.msk [vmem:[%s7 + $0x8] sm:$0xff] %vm767, %v1041
    %1058 = vst.msk [vmem:[%s7 + $0x10] sm:$0xff] %vm767, %v1042
    %1059 = vst.msk [vmem:[%s7 + $0x18] sm:$0xff] %vm767, %v1043
    %1060 = vst.msk [vmem:[%s7 + $0x20] sm:$0xff] %vm767, %v1044
    %1061 = vst.msk [vmem:[%s7 + $0x28] sm:$0xff] %vm767, %v1045
    %1062 = vst.msk [vmem:[%s7 + $0x30] sm:$0xff] %vm767, %v1046
    %1063 = vst.msk [vmem:[%s7 + $0x38] sm:$0xff] %vm767, %v1047
    %1064 = vst.msk [vmem:[%s7 + $0x40] sm:$0xff] %vm767, %v1048
    %1065 = vst.msk [vmem:[%s7 + $0x48] sm:$0xff] %vm767, %v1049
    %1066 = vst.msk [vmem:[%s7 + $0x50] sm:$0xff] %vm767, %v1050
    %1067 = vst.msk [vmem:[%s7 + $0x58] sm:$0xff] %vm767, %v1051
    %1068 = vst.msk [vmem:[%s7 + $0x60] sm:$0xff] %vm767, %v1052
    %1069 = vst.msk [vmem:[%s7 + $0x68] sm:$0xff] %vm767, %v1053
    %1070 = vst.msk [vmem:[%s7 + $0x70] sm:$0xff] %vm767, %v1054
    %1071 = vst.msk [vmem:[%s7 + $0x78] sm:$0xff] %vm767, %v1055
    %v1072 = vsel %vm767, %v1040, -inf
    %1073 = vmax.xlane.f32.xlu0 %v1072
    %v1074 = vpop.xlane.xlu0 %1073
    %v1075 = vsel %vm767, %v1041, -inf
    %1076 = vmax.xlane.f32.xlu0 %v1075
    %v1077 = vpop.xlane.xlu0 %1076
    %v1078 = vsel %vm767, %v1042, -inf
    %1079 = vmax.xlane.f32.xlu0 %v1078
    %v1080 = vpop.xlane.xlu0 %1079
    %v1081 = vsel %vm767, %v1043, -inf
    %1082 = vmax.xlane.f32.xlu0 %v1081
    %v1083 = vpop.xlane.xlu0 %1082
    %v1084 = vsel %vm767, %v1044, -inf
    %1085 = vmax.xlane.f32.xlu0 %v1084
    %v1086 = vpop.xlane.xlu0 %1085
    %v1087 = vsel %vm767, %v1045, -inf
    %1088 = vmax.xlane.f32.xlu0 %v1087
    %v1089 = vpop.xlane.xlu0 %1088
    %v1090 = vsel %vm767, %v1046, -inf
    %1091 = vmax.xlane.f32.xlu0 %v1090
    %v1092 = vpop.xlane.xlu0 %1091
    %v1093 = vsel %vm767, %v1047, -inf
    %1094 = vmax.xlane.f32.xlu0 %v1093
    %v1095 = vpop.xlane.xlu0 %1094
    %v1096 = vsel %vm767, %v1048, -inf
    %1097 = vmax.xlane.f32.xlu0 %v1096
    %v1098 = vpop.xlane.xlu0 %1097
    %v1099 = vsel %vm767, %v1049, -inf
    %1100 = vmax.xlane.f32.xlu0 %v1099
    %v1101 = vpop.xlane.xlu0 %1100
    %v1102 = vsel %vm767, %v1050, -inf
    %1103 = vmax.xlane.f32.xlu0 %v1102
    %v1104 = vpop.xlane.xlu0 %1103
    %v1105 = vsel %vm767, %v1051, -inf
    %1106 = vmax.xlane.f32.xlu0 %v1105
    %v1107 = vpop.xlane.xlu0 %1106
    %v1108 = vsel %vm767, %v1052, -inf
    %1109 = vmax.xlane.f32.xlu0 %v1108
    %v1110 = vpop.xlane.xlu0 %1109
    %v1111 = vsel %vm767, %v1053, -inf
    %1112 = vmax.xlane.f32.xlu0 %v1111
    %v1113 = vpop.xlane.xlu0 %1112
    %v1114 = vsel %vm767, %v1054, -inf
    %1115 = vmax.xlane.f32.xlu0 %v1114
    %v1116 = vpop.xlane.xlu0 %1115
    %v1117 = vsel %vm767, %v1055, -inf
    %1118 = vmax.xlane.f32.xlu0 %v1117
    %v1119 = vpop.xlane.xlu0 %1118
    %v1120 = vsub.f32 %v1040, %v1074
    %v1121 = vsub.f32 %v1041, %v1077
    %v1122 = vsub.f32 %v1042, %v1080
    %v1123 = vsub.f32 %v1043, %v1083
    %v1124 = vsub.f32 %v1044, %v1086
    %v1125 = vsub.f32 %v1045, %v1089
    %v1126 = vsub.f32 %v1046, %v1092
    %v1127 = vsub.f32 %v1047, %v1095
    %v1128 = vsub.f32 %v1048, %v1098
    %v1129 = vsub.f32 %v1049, %v1101
    %v1130 = vsub.f32 %v1050, %v1104
    %v1131 = vsub.f32 %v1051, %v1107
    %v1132 = vsub.f32 %v1052, %v1110
    %v1133 = vsub.f32 %v1053, %v1113
    %v1134 = vsub.f32 %v1054, %v1116
    %v1135 = vsub.f32 %v1055, %v1119
    %v1136 = vmul.f32 %v1120, 1.442695
    %v1137 = vpow.pop %v1136
    %v1138 = vmul.f32 %v1121, 1.442695
    %v1139 = vpow.pop %v1138
    %v1140 = vmul.f32 %v1122, 1.442695
    %v1141 = vpow.pop %v1140
    %v1142 = vmul.f32 %v1123, 1.442695
    %v1143 = vpow.pop %v1142
    %v1144 = vmul.f32 %v1124, 1.442695
    %v1145 = vpow.pop %v1144
    %v1146 = vmul.f32 %v1125, 1.442695
    %v1147 = vpow.pop %v1146
    %v1148 = vmul.f32 %v1126, 1.442695
    %v1149 = vpow.pop %v1148
    %v1150 = vmul.f32 %v1127, 1.442695
    %v1151 = vpow.pop %v1150
    %v1152 = vmul.f32 %v1128, 1.442695
    %v1153 = vpow.pop %v1152
    %v1154 = vmul.f32 %v1129, 1.442695
    %v1155 = vpow.pop %v1154
    %v1156 = vmul.f32 %v1130, 1.442695
    %v1157 = vpow.pop %v1156
    %v1158 = vmul.f32 %v1131, 1.442695
    %v1159 = vpow.pop %v1158
    %v1160 = vmul.f32 %v1132, 1.442695
    %v1161 = vpow.pop %v1160
    %v1162 = vmul.f32 %v1133, 1.442695
    %v1163 = vpow.pop %v1162
    %v1164 = vmul.f32 %v1134, 1.442695
    %v1165 = vpow.pop %v1164
    %v1166 = vmul.f32 %v1135, 1.442695
    %v1167 = vpow.pop %v1166
    %v1168 = vsel %vm767, %v1137, 0.0
    %1169 = vadd.xlane.f32.xlu0 %v1168
    %v1170 = vpop.xlane.xlu0 %1169
    %v1171 = vsel %vm767, %v1139, 0.0
    %1172 = vadd.xlane.f32.xlu0 %v1171
    %v1173 = vpop.xlane.xlu0 %1172
    %v1174 = vsel %vm767, %v1141, 0.0
    %1175 = vadd.xlane.f32.xlu0 %v1174
    %v1176 = vpop.xlane.xlu0 %1175
    %v1177 = vsel %vm767, %v1143, 0.0
    %1178 = vadd.xlane.f32.xlu0 %v1177
    %v1179 = vpop.xlane.xlu0 %1178
    %v1180 = vsel %vm767, %v1145, 0.0
    %1181 = vadd.xlane.f32.xlu0 %v1180
    %v1182 = vpop.xlane.xlu0 %1181
    %v1183 = vsel %vm767, %v1147, 0.0
    %1184 = vadd.xlane.f32.xlu0 %v1183
    %v1185 = vpop.xlane.xlu0 %1184
    %v1186 = vsel %vm767, %v1149, 0.0
    %1187 = vadd.xlane.f32.xlu0 %v1186
    %v1188 = vpop.xlane.xlu0 %1187
    %v1189 = vsel %vm767, %v1151, 0.0
    %1190 = vadd.xlane.f32.xlu0 %v1189
    %v1191 = vpop.xlane.xlu0 %1190
    %v1192 = vsel %vm767, %v1153, 0.0
    %1193 = vadd.xlane.f32.xlu0 %v1192
    %v1194 = vpop.xlane.xlu0 %1193
    %v1195 = vsel %vm767, %v1155, 0.0
    %1196 = vadd.xlane.f32.xlu0 %v1195
    %v1197 = vpop.xlane.xlu0 %1196
    %v1198 = vsel %vm767, %v1157, 0.0
    %1199 = vadd.xlane.f32.xlu0 %v1198
    %v1200 = vpop.xlane.xlu0 %1199
    %v1201 = vsel %vm767, %v1159, 0.0
    %1202 = vadd.xlane.f32.xlu0 %v1201
    %v1203 = vpop.xlane.xlu0 %1202
    %v1204 = vsel %vm767, %v1161, 0.0
    %1205 = vadd.xlane.f32.xlu0 %v1204
    %v1206 = vpop.xlane.xlu0 %1205
    %v1207 = vsel %vm767, %v1163, 0.0
    %1208 = vadd.xlane.f32.xlu0 %v1207
    %v1209 = vpop.xlane.xlu0 %1208
    %v1210 = vsel %vm767, %v1165, 0.0
    %1211 = vadd.xlane.f32.xlu0 %v1210
    %v1212 = vpop.xlane.xlu0 %1211
    %v1213 = vsel %vm767, %v1167, 0.0
    %1214 = vadd.xlane.f32.xlu0 %v1213
    %v1215 = vpop.xlane.xlu0 %1214
    %v1216 = vrcp.pop %v1170
    %v1217 = vmul.f32 %v1137, %v1216
    %v1218 = vrcp.pop %v1173
    %v1219 = vmul.f32 %v1139, %v1218
    %v1220 = vrcp.pop %v1176
    %v1221 = vmul.f32 %v1141, %v1220
    %v1222 = vrcp.pop %v1179
    %v1223 = vmul.f32 %v1143, %v1222
    %v1224 = vrcp.pop %v1182
    %v1225 = vmul.f32 %v1145, %v1224
    %v1226 = vrcp.pop %v1185
    %v1227 = vmul.f32 %v1147, %v1226
    %v1228 = vrcp.pop %v1188
    %v1229 = vmul.f32 %v1149, %v1228
    %v1230 = vrcp.pop %v1191
    %v1231 = vmul.f32 %v1151, %v1230
    %v1232 = vrcp.pop %v1194
    %v1233 = vmul.f32 %v1153, %v1232
    %v1234 = vrcp.pop %v1197
    %v1235 = vmul.f32 %v1155, %v1234
    %v1236 = vrcp.pop %v1200
    %v1237 = vmul.f32 %v1157, %v1236
    %v1238 = vrcp.pop %v1203
    %v1239 = vmul.f32 %v1159, %v1238
    %v1240 = vrcp.pop %v1206
    %v1241 = vmul.f32 %v1161, %v1240
    %v1242 = vrcp.pop %v1209
    %v1243 = vmul.f32 %v1163, %v1242
    %v1244 = vrcp.pop %v1212
    %v1245 = vmul.f32 %v1165, %v1244
    %v1246 = vrcp.pop %v1215
    %v1247 = vmul.f32 %v1167, %v1246
    %1248 = vst.msk [vmem:[%s8] sm:$0xff] %vm767, %v1217
    %1249 = vst.msk [vmem:[%s8 + $0x8] sm:$0xff] %vm767, %v1219
    %1250 = vst.msk [vmem:[%s8 + $0x10] sm:$0xff] %vm767, %v1221
    %1251 = vst.msk [vmem:[%s8 + $0x18] sm:$0xff] %vm767, %v1223
    %1252 = vst.msk [vmem:[%s8 + $0x20] sm:$0xff] %vm767, %v1225
    %1253 = vst.msk [vmem:[%s8 + $0x28] sm:$0xff] %vm767, %v1227
    %1254 = vst.msk [vmem:[%s8 + $0x30] sm:$0xff] %vm767, %v1229
    %1255 = vst.msk [vmem:[%s8 + $0x38] sm:$0xff] %vm767, %v1231
    %1256 = vst.msk [vmem:[%s8 + $0x40] sm:$0xff] %vm767, %v1233
    %1257 = vst.msk [vmem:[%s8 + $0x48] sm:$0xff] %vm767, %v1235
    %1258 = vst.msk [vmem:[%s8 + $0x50] sm:$0xff] %vm767, %v1237
    %1259 = vst.msk [vmem:[%s8 + $0x58] sm:$0xff] %vm767, %v1239
    %1260 = vst.msk [vmem:[%s8 + $0x60] sm:$0xff] %vm767, %v1241
    %1261 = vst.msk [vmem:[%s8 + $0x68] sm:$0xff] %vm767, %v1243
    %1262 = vst.msk [vmem:[%s8 + $0x70] sm:$0xff] %vm767, %v1245
    %1263 = vst.msk [vmem:[%s8 + $0x78] sm:$0xff] %vm767, %v1247
  $region37: #{dmon_forward.4} parent=0 // pred_fallthru
    _
  // Predicated region
  $region38: #{dmon_forward.4} parent=0 // pred_check
    _
  $region39: #{dmon_forward.4} parent=0 // pred_check_branch
    %1265 = sbr.rel (0) target = $region41
  $region40: #{dmon_forward.4} parent=0 // pred_region
    _
  $region41: #{dmon_forward.4} parent=0 // pred_fallthru
    _
  // Predicated region
  $region42: #{dmon_forward.4} parent=0 // pred_check
    _
  $region43: #{dmon_forward.4} parent=0 // pred_check_branch
    %1267 = sbr.rel (0) target = $region45
  $region44: #{dmon_forward.4} parent=0 // pred_region
    _
  $region45: #{dmon_forward.4} parent=0 // pred_fallthru
    _
  // Predicated region
  $region46: #{dmon_forward.4} parent=0 // pred_check
    _
  $region47: #{dmon_forward.4} parent=0 // pred_check_branch
    %1269 = sbr.rel (0) target = $region49
  $region48: #{dmon_forward.4} parent=0 // pred_region
    _
  $region49: #{dmon_forward.4} parent=0 // pred_fallthru
    _
  // Predicated region
  $region50: #{dmon_forward.4} parent=0 // pred_check
    _
  $region51: #{dmon_forward.4} parent=0 // pred_check_branch
    %1271 = sbr.rel (0) target = $region53
  $region52: #{dmon_forward.4} parent=0 // pred_region
    _
  $region53: #{dmon_forward.4} parent=0 // pred_fallthru
    _

// kernel: dmon_forward.3
$region0: #{dmon_forward.3}
  #allocation0 [shape = 'u32[]', space=smem, size = 0x4, offset = 0x4, fixed_abs, tag = 'smem constant byte address 0x4 - core index']
  #allocation1 [shape = 'u32[144,128]{1,0:T(1,128)}', space=vmem, size = 0x12000, scoped, tag = 'internal scratch']
  #allocation2 [shape = 'f32[128,4]{1,0:T(8,128)}', space=vmem, size = 0x10000, scoped, tag = 'scratch operand']
  %s0 = inlined_call_operand.vmem [shape: bf16[128,128], index: 0, kind: input, shape index: {}]
  %s1 = inlined_call_operand.vmem [shape: bf16[128,4], index: 1, kind: input, shape index: {}]
  %s2 = inlined_call_operand.vmem [shape: f32[4,32], index: 2, kind: input, shape index: {}]
  %s3 = inlined_call_operand.vmem [shape: f32[1,32], index: 3, kind: input, shape index: {}]
  %s4 = inlined_call_operand.vmem [shape: bf16[128,32], index: 4, kind: output, shape index: {}]
  %s5 = sld [smem:[#allocation0]]
  $region34: #{dmon_forward.3} parent=0
    _
  %s7 = ssub.s32 1, %s5
  %s8 = scalar_select 0, %s7, %s5
  // Predicated region
  $region2: #{dmon_forward.3} parent=0 // pred_check
    _
  $region3: #{dmon_forward.3} parent=0 // pred_check_branch
    %10 = sbr.rel (0) target = $region5
  $region4: #{dmon_forward.3} parent=0 // pred_region
    _
  $region5: #{dmon_forward.3} parent=0 // pred_fallthru
    _
  // Predicated region
  $region6: #{dmon_forward.3} parent=0 // pred_check
    _
  $region7: #{dmon_forward.3} parent=0 // pred_check_branch
    %12 = sbr.rel (0) target = $region9
  $region8: #{dmon_forward.3} parent=0 // pred_region
    _
  $region9: #{dmon_forward.3} parent=0 // pred_fallthru
    _
  // Predicated region
  $region10: #{dmon_forward.3} parent=0 // pred_check
    _
  $region11: #{dmon_forward.3} parent=0 // pred_check_branch
    %14 = sbr.rel (0) target = $region13
  $region12: #{dmon_forward.3} parent=0 // pred_region
    _
  $region13: #{dmon_forward.3} parent=0 // pred_fallthru
    _
  // Predicated region
  $region14: #{dmon_forward.3} parent=0 // pred_check
    _
  $region15: #{dmon_forward.3} parent=0 // pred_check_branch
    %16 = sbr.rel (0) target = $region17
  $region16: #{dmon_forward.3} parent=0 // pred_region
    _
  $region17: #{dmon_forward.3} parent=0 // pred_fallthru
    _
  %p18 = scmp.eq.s32.totalorder 0, 0
  // Predicated region
  $region18: #{dmon_forward.3} parent=0 // pred_check
    %p19 = pneg %p18
  $region19: #{dmon_forward.3} parent=0 // pred_check_branch
    %21 = sbr.rel (%p19) target = $region21
  $region20: #{dmon_forward.3} parent=0 // pred_region
    %vm22 = vcmask 31744
    %23 = vst.msk [vmem:[#allocation2] sm:$0xff] %vm22, 0.0
    %24 = vst.msk [vmem:[#allocation2 + $0x8] sm:$0xff] %vm22, 0.0
    %25 = vst.msk [vmem:[#allocation2 + $0x10] sm:$0xff] %vm22, 0.0
    %26 = vst.msk [vmem:[#allocation2 + $0x18] sm:$0xff] %vm22, 0.0
    %27 = vst.msk [vmem:[#allocation2 + $0x20] sm:$0xff] %vm22, 0.0
    %28 = vst.msk [vmem:[#allocation2 + $0x28] sm:$0xff] %vm22, 0.0
    %29 = vst.msk [vmem:[#allocation2 + $0x30] sm:$0xff] %vm22, 0.0
    %30 = vst.msk [vmem:[#allocation2 + $0x38] sm:$0xff] %vm22, 0.0
    %31 = vst.msk [vmem:[#allocation2 + $0x40] sm:$0xff] %vm22, 0.0
    %32 = vst.msk [vmem:[#allocation2 + $0x48] sm:$0xff] %vm22, 0.0
    %33 = vst.msk [vmem:[#allocation2 + $0x50] sm:$0xff] %vm22, 0.0
    %34 = vst.msk [vmem:[#allocation2 + $0x58] sm:$0xff] %vm22, 0.0
    %35 = vst.msk [vmem:[#allocation2 + $0x60] sm:$0xff] %vm22, 0.0
    %36 = vst.msk [vmem:[#allocation2 + $0x68] sm:$0xff] %vm22, 0.0
    %37 = vst.msk [vmem:[#allocation2 + $0x70] sm:$0xff] %vm22, 0.0
    %38 = vst.msk [vmem:[#allocation2 + $0x78] sm:$0xff] %vm22, 0.0
  $region21: #{dmon_forward.3} parent=0 // pred_fallthru
    _
  %v39 = vld [vmem:[#allocation2] sm:$0xff]
  %v40 = vld [vmem:[#allocation2 + $0x8] sm:$0xff]
  %v41 = vld [vmem:[#allocation2 + $0x10] sm:$0xff]
  %v42 = vld [vmem:[#allocation2 + $0x18] sm:$0xff]
  %v43 = vld [vmem:[#allocation2 + $0x20] sm:$0xff]
  %v44 = vld [vmem:[#allocation2 + $0x28] sm:$0xff]
  %v45 = vld [vmem:[#allocation2 + $0x30] sm:$0xff]
  %v46 = vld [vmem:[#allocation2 + $0x38] sm:$0xff]
  %v47 = vld [vmem:[#allocation2 + $0x40] sm:$0xff]
  %v48 = vld [vmem:[#allocation2 + $0x48] sm:$0xff]
  %v49 = vld [vmem:[#allocation2 + $0x50] sm:$0xff]
  %v50 = vld [vmem:[#allocation2 + $0x58] sm:$0xff]
  %v51 = vld [vmem:[#allocation2 + $0x60] sm:$0xff]
  %v52 = vld [vmem:[#allocation2 + $0x68] sm:$0xff]
  %v53 = vld [vmem:[#allocation2 + $0x70] sm:$0xff]
  %v54 = vld [vmem:[#allocation2 + $0x78] sm:$0xff]
  %v55 = vld [vmem:[%s0] sm:$0xf]
  %v56 = vld [vmem:[%s0 + $0x4] sm:$0xf]
  %v57 = vld [vmem:[%s0 + $0x8] sm:$0xf]
  %v58 = vld [vmem:[%s0 + $0xc] sm:$0xf]
  %v59 = vld [vmem:[%s0 + $0x10] sm:$0xf]
  %v60 = vld [vmem:[%s0 + $0x14] sm:$0xf]
  %v61 = vld [vmem:[%s0 + $0x18] sm:$0xf]
  %v62 = vld [vmem:[%s0 + $0x1c] sm:$0xf]
  %v63 = vld [vmem:[%s0 + $0x20] sm:$0xf]
  %v64 = vld [vmem:[%s0 + $0x24] sm:$0xf]
  %v65 = vld [vmem:[%s0 + $0x28] sm:$0xf]
  %v66 = vld [vmem:[%s0 + $0x2c] sm:$0xf]
  %v67 = vld [vmem:[%s0 + $0x30] sm:$0xf]
  %v68 = vld [vmem:[%s0 + $0x34] sm:$0xf]
  %v69 = vld [vmem:[%s0 + $0x38] sm:$0xf]
  %v70 = vld [vmem:[%s0 + $0x3c] sm:$0xf]
  %v71 = vld [vmem:[%s1] sm:$0xf]
  %v72 = vld [vmem:[%s1 + $0x4] sm:$0xf]
  %v73 = vld [vmem:[%s1 + $0x8] sm:$0xf]
  %v74 = vld [vmem:[%s1 + $0xc] sm:$0xf]
  %v75 = vld [vmem:[%s1 + $0x10] sm:$0xf]
  %v76 = vld [vmem:[%s1 + $0x14] sm:$0xf]
  %v77 = vld [vmem:[%s1 + $0x18] sm:$0xf]
  %v78 = vld [vmem:[%s1 + $0x1c] sm:$0xf]
  %v79 = vld [vmem:[%s1 + $0x20] sm:$0xf]
  %v80 = vld [vmem:[%s1 + $0x24] sm:$0xf]
  %v81 = vld [vmem:[%s1 + $0x28] sm:$0xf]
  %v82 = vld [vmem:[%s1 + $0x2c] sm:$0xf]
  %v83 = vld [vmem:[%s1 + $0x30] sm:$0xf]
  %v84 = vld [vmem:[%s1 + $0x34] sm:$0xf]
  %v85 = vld [vmem:[%s1 + $0x38] sm:$0xf]
  %v86 = vld [vmem:[%s1 + $0x3c] sm:$0xf]
  %v103 = vunpack.c.l.b16 %v55
  %v104 = vunpack.c.l.b16 %v56
  %v105 = vunpack.c.l.b16 %v57
  %v106 = vunpack.c.l.b16 %v58
  %v107 = vunpack.c.l.b16 %v59
  %v108 = vunpack.c.l.b16 %v60
  %v109 = vunpack.c.l.b16 %v61
  %v110 = vunpack.c.l.b16 %v62
  %v111 = vunpack.c.l.b16 %v63
  %v112 = vunpack.c.l.b16 %v64
  %v113 = vunpack.c.l.b16 %v65
  %v114 = vunpack.c.l.b16 %v66
  %v115 = vunpack.c.l.b16 %v67
  %v116 = vunpack.c.l.b16 %v68
  %v117 = vunpack.c.l.b16 %v69
  %v118 = vunpack.c.l.b16 %v70
  %v119 = vpack.c.b16 %v104, %v103
  %v120 = vpack.c.b16 %v106, %v105
  %v121 = vpack.c.b16 %v108, %v107
  %v122 = vpack.c.b16 %v110, %v109
  %v123 = vpack.c.b16 %v112, %v111
  %v124 = vpack.c.b16 %v114, %v113
  %v125 = vpack.c.b16 %v116, %v115
  %v126 = vpack.c.b16 %v118, %v117
  %v151 = vunpack.c.l.b16 %v71
  %v152 = vunpack.c.l.b16 %v72
  %v153 = vunpack.c.l.b16 %v73
  %v154 = vunpack.c.l.b16 %v74
  %v155 = vunpack.c.l.b16 %v75
  %v156 = vunpack.c.l.b16 %v76
  %v157 = vunpack.c.l.b16 %v77
  %v158 = vunpack.c.l.b16 %v78
  %v159 = vunpack.c.l.b16 %v79
  %v160 = vunpack.c.l.b16 %v80
  %v161 = vunpack.c.l.b16 %v81
  %v162 = vunpack.c.l.b16 %v82
  %v163 = vunpack.c.l.b16 %v83
  %v164 = vunpack.c.l.b16 %v84
  %v165 = vunpack.c.l.b16 %v85
  %v166 = vunpack.c.l.b16 %v86
  %v167 = vpack.c.b16 %v152, %v151
  %v168 = vpack.c.b16 %v154, %v153
  %v169 = vpack.c.b16 %v156, %v155
  %v170 = vpack.c.b16 %v158, %v157
  %v171 = vpack.c.b16 %v160, %v159
  %v172 = vpack.c.b16 %v162, %v161
  %v173 = vpack.c.b16 %v164, %v163
  %v174 = vpack.c.b16 %v166, %v165
  %183 = vmatprep.subr.bf16.mxu0 0
  %184 = vmatpush1.bf16.msra.mxu0 %v174
  %185 = vmatprep.subr.bf16.mxu0 0
  %186 = vmatpush1.bf16.msra.mxu0 %v173
  %187 = vmatprep.subr.bf16.mxu0 0
  %188 = vmatpush1.bf16.msra.mxu0 %v172
  %189 = vmatprep.subr.bf16.mxu0 0
  %190 = vmatpush1.bf16.msra.mxu0 %v171
  %191 = vmatprep.subr.bf16.mxu0 0
  %192 = vmatpush1.bf16.msra.mxu0 %v170
  %193 = vmatprep.subr.bf16.mxu0 0
  %194 = vmatpush1.bf16.msra.mxu0 %v169
  %195 = vmatprep.subr.bf16.mxu0 0
  %196 = vmatpush1.bf16.msra.mxu0 %v168
  %197 = vmatprep.subr.bf16.mxu0 0
  %198 = vmatpush1.bf16.msra.mxu0 %v167
  %199 = vmatprep.subr.bf16.mxu0 0
  %200 = vmatpush2.bf16.msra.mxu0 0
  %201 = vmatprep.subr.bf16.mxu0 0
  %202 = vmatpush2.bf16.msra.mxu0 0
  %203 = vmatprep.subr.bf16.mxu0 0
  %204 = vmatpush2.bf16.msra.mxu0 0
  %205 = vmatprep.subr.bf16.mxu0 0
  %206 = vmatpush2.bf16.msra.mxu0 0
  %207 = vmatprep.subr.bf16.mxu0 0
  %208 = vmatpush2.bf16.msra.mxu0 0
  %209 = vmatprep.subr.bf16.mxu0 0
  %210 = vmatpush2.bf16.msra.mxu0 0
  %211 = vmatprep.subr.bf16.mxu0 0
  %212 = vmatpush2.bf16.msra.mxu0 0
  %213 = vmatprep.subr.bf16.mxu0 0
  %214 = vmatpush2.bf16.msra.mxu0 0
  %215 = vmatprep.mubr.bf16.mxu0 0
  %216 = vmatmul.mubr.bf16.gmra.mxu0 %v119
  %v217 = vpop.f32.mrf.mxu0
  %v218 = vadd.f32 0.0, %v217
  %v219 = vpop.f32.mrf.mxu0
  %v220 = vpop.f32.mrf.mxu0
  %v221 = vadd.f32 0.0, %v220
  %v222 = vpop.f32.mrf.mxu0
  %223 = vmatprep.mubr.bf16.mxu0 0
  %224 = vmatmul.mubr.bf16.gmra.mxu0 %v120
  %v225 = vpop.f32.mrf.mxu0
  %v226 = vadd.f32 0.0, %v225
  %v227 = vpop.f32.mrf.mxu0
  %v228 = vpop.f32.mrf.mxu0
  %v229 = vadd.f32 0.0, %v228
  %v230 = vpop.f32.mrf.mxu0
  %231 = vmatprep.mubr.bf16.mxu0 0
  %232 = vmatmul.mubr.bf16.gmra.mxu0 %v121
  %v233 = vpop.f32.mrf.mxu0
  %v234 = vadd.f32 0.0, %v233
  %v235 = vpop.f32.mrf.mxu0
  %v236 = vpop.f32.mrf.mxu0
  %v237 = vadd.f32 0.0, %v236
  %v238 = vpop.f32.mrf.mxu0
  %239 = vmatprep.mubr.bf16.mxu0 0
  %240 = vmatmul.mubr.bf16.gmra.mxu0 %v122
  %v241 = vpop.f32.mrf.mxu0
  %v242 = vadd.f32 0.0, %v241
  %v243 = vpop.f32.mrf.mxu0
  %v244 = vpop.f32.mrf.mxu0
  %v245 = vadd.f32 0.0, %v244
  %v246 = vpop.f32.mrf.mxu0
  %247 = vmatprep.mubr.bf16.mxu0 0
  %248 = vmatmul.mubr.bf16.gmra.mxu0 %v123
  %v249 = vpop.f32.mrf.mxu0
  %v250 = vadd.f32 0.0, %v249
  %v251 = vpop.f32.mrf.mxu0
  %v252 = vpop.f32.mrf.mxu0
  %v253 = vadd.f32 0.0, %v252
  %v254 = vpop.f32.mrf.mxu0
  %255 = vmatprep.mubr.bf16.mxu0 0
  %256 = vmatmul.mubr.bf16.gmra.mxu0 %v124
  %v257 = vpop.f32.mrf.mxu0
  %v258 = vadd.f32 0.0, %v257
  %v259 = vpop.f32.mrf.mxu0
  %v260 = vpop.f32.mrf.mxu0
  %v261 = vadd.f32 0.0, %v260
  %v262 = vpop.f32.mrf.mxu0
  %263 = vmatprep.mubr.bf16.mxu0 0
  %264 = vmatmul.mubr.bf16.gmra.mxu0 %v125
  %v265 = vpop.f32.mrf.mxu0
  %v266 = vadd.f32 0.0, %v265
  %v267 = vpop.f32.mrf.mxu0
  %v268 = vpop.f32.mrf.mxu0
  %v269 = vadd.f32 0.0, %v268
  %v270 = vpop.f32.mrf.mxu0
  %271 = vmatprep.mubr.bf16.mxu0 0
  %272 = vmatmul.mubr.bf16.gmra.mxu0 %v126
  %v273 = vpop.f32.mrf.mxu0
  %v274 = vadd.f32 0.0, %v273
  %v275 = vpop.f32.mrf.mxu0
  %v276 = vpop.f32.mrf.mxu0
  %v277 = vadd.f32 0.0, %v276
  %v278 = vpop.f32.mrf.mxu0
  %279 = vdwg.mxu0
  %v280 = vadd.f32 %v39, %v218
  %v281 = vadd.f32 %v40, %v221
  %v282 = vadd.f32 %v41, %v226
  %v283 = vadd.f32 %v42, %v229
  %v284 = vadd.f32 %v43, %v234
  %v285 = vadd.f32 %v44, %v237
  %v286 = vadd.f32 %v45, %v242
  %v287 = vadd.f32 %v46, %v245
  %v288 = vadd.f32 %v47, %v250
  %v289 = vadd.f32 %v48, %v253
  %v290 = vadd.f32 %v49, %v258
  %v291 = vadd.f32 %v50, %v261
  %v292 = vadd.f32 %v51, %v266
  %v293 = vadd.f32 %v52, %v269
  %v294 = vadd.f32 %v53, %v274
  %v295 = vadd.f32 %v54, %v277
  %vm296 = vcmask 31744
  %297 = vst.msk [vmem:[#allocation2] sm:$0xff] %vm296, %v280
  %298 = vst.msk [vmem:[#allocation2 + $0x8] sm:$0xff] %vm296, %v281
  %299 = vst.msk [vmem:[#allocation2 + $0x10] sm:$0xff] %vm296, %v282
  %300 = vst.msk [vmem:[#allocation2 + $0x18] sm:$0xff] %vm296, %v283
  %301 = vst.msk [vmem:[#allocation2 + $0x20] sm:$0xff] %vm296, %v284
  %302 = vst.msk [vmem:[#allocation2 + $0x28] sm:$0xff] %vm296, %v285
  %303 = vst.msk [vmem:[#allocation2 + $0x30] sm:$0xff] %vm296, %v286
  %304 = vst.msk [vmem:[#allocation2 + $0x38] sm:$0xff] %vm296, %v287
  %305 = vst.msk [vmem:[#allocation2 + $0x40] sm:$0xff] %vm296, %v288
  %306 = vst.msk [vmem:[#allocation2 + $0x48] sm:$0xff] %vm296, %v289
  %307 = vst.msk [vmem:[#allocation2 + $0x50] sm:$0xff] %vm296, %v290
  %308 = vst.msk [vmem:[#allocation2 + $0x58] sm:$0xff] %vm296, %v291
  %309 = vst.msk [vmem:[#allocation2 + $0x60] sm:$0xff] %vm296, %v292
  %310 = vst.msk [vmem:[#allocation2 + $0x68] sm:$0xff] %vm296, %v293
  %311 = vst.msk [vmem:[#allocation2 + $0x70] sm:$0xff] %vm296, %v294
  %312 = vst.msk [vmem:[#allocation2 + $0x78] sm:$0xff] %vm296, %v295
  // Predicated region
  $region22: #{dmon_forward.3} parent=0 // pred_check
    %p313 = pneg %p18
  $region23: #{dmon_forward.3} parent=0 // pred_check_branch
    %315 = sbr.rel (%p313) target = $region25
  $region24: #{dmon_forward.3} parent=0 // pred_region
    %v316 = vld [vmem:[#allocation2] sm:$0xff]
    %v317 = vld [vmem:[#allocation2 + $0x8] sm:$0xff]
    %v318 = vld [vmem:[#allocation2 + $0x10] sm:$0xff]
    %v319 = vld [vmem:[#allocation2 + $0x18] sm:$0xff]
    %v320 = vld [vmem:[#allocation2 + $0x20] sm:$0xff]
    %v321 = vld [vmem:[#allocation2 + $0x28] sm:$0xff]
    %v322 = vld [vmem:[#allocation2 + $0x30] sm:$0xff]
    %v323 = vld [vmem:[#allocation2 + $0x38] sm:$0xff]
    %v324 = vld [vmem:[#allocation2 + $0x40] sm:$0xff]
    %v325 = vld [vmem:[#allocation2 + $0x48] sm:$0xff]
    %v326 = vld [vmem:[#allocation2 + $0x50] sm:$0xff]
    %v327 = vld [vmem:[#allocation2 + $0x58] sm:$0xff]
    %v328 = vld [vmem:[#allocation2 + $0x60] sm:$0xff]
    %v329 = vld [vmem:[#allocation2 + $0x68] sm:$0xff]
    %v330 = vld [vmem:[#allocation2 + $0x70] sm:$0xff]
    %v331 = vld [vmem:[#allocation2 + $0x78] sm:$0xff]
    %v332 = vld [vmem:[%s2] sm:$0xf]
    %v333 = vld [vmem:[%s3] sm:$0x1]
    %v335 = vlaneseq
    %v336 = vshrl.u32 %v335, 7
    %v337 = vsub.s32 0, %v336
    %v338 = vrot.slane %v333, %v337
    %v341 = vsel %vm296, %v316, 0
    %v344 = vsel %vm296, %v317, 0
    %v347 = vsel %vm296, %v318, 0
    %v350 = vsel %vm296, %v319, 0
    %v353 = vsel %vm296, %v320, 0
    %v356 = vsel %vm296, %v321, 0
    %v359 = vsel %vm296, %v322, 0
    %v362 = vsel %vm296, %v323, 0
    %v365 = vsel %vm296, %v324, 0
    %v368 = vsel %vm296, %v325, 0
    %v371 = vsel %vm296, %v326, 0
    %v374 = vsel %vm296, %v327, 0
    %v377 = vsel %vm296, %v328, 0
    %v380 = vsel %vm296, %v329, 0
    %v383 = vsel %vm296, %v330, 0
    %v386 = vsel %vm296, %v331, 0
    %vm388 = vcmask 1043456
    %v390 = vsel %vm388, %v332, 0
    %392 = vmatprep.subr.mxu0 0.0
    %393 = vmatpush1.msra.mxu0 0.0
    %394 = vmatprep.subr.mxu0 0.0
    %395 = vmatpush1.msra.mxu0 0.0
    %396 = vmatprep.subr.mxu0 0.0
    %397 = vmatpush1.msra.mxu0 0.0
    %398 = vmatprep.subr.mxu0 0.0
    %399 = vmatpush1.msra.mxu0 0.0
    %400 = vmatprep.subr.mxu0 0.0
    %401 = vmatpush1.msra.mxu0 0.0
    %402 = vmatprep.subr.mxu0 0.0
    %403 = vmatpush1.msra.mxu0 0.0
    %404 = vmatprep.subr.mxu0 0.0
    %405 = vmatpush1.msra.mxu0 0.0
    %406 = vmatprep.subr.mxu0 0.0
    %407 = vmatpush1.msra.mxu0 0.0
    %408 = vmatprep.subr.mxu0 0.0
    %409 = vmatpush1.msra.mxu0 0.0
    %410 = vmatprep.subr.mxu0 0.0
    %411 = vmatpush1.msra.mxu0 0.0
    %412 = vmatprep.subr.mxu0 0.0
    %413 = vmatpush1.msra.mxu0 0.0
    %414 = vmatprep.subr.mxu0 0.0
    %415 = vmatpush1.msra.mxu0 0.0
    %416 = vmatprep.subr.mxu0 0.0
    %417 = vmatpush1.msra.mxu0 0.0
    %418 = vmatprep.subr.mxu0 0.0
    %419 = vmatpush1.msra.mxu0 0.0
    %420 = vmatprep.subr.mxu0 0.0
    %421 = vmatpush1.msra.mxu0 0.0
    %422 = vmatprep.subr.mxu0 0.0
    %423 = vmatpush1.msra.mxu0 %v390
    %424 = vmatprep.subr.mxu0 0.0
    %425 = vmatpush2.msra.mxu0 0.0
    %426 = vmatprep.subr.mxu0 0.0
    %427 = vmatpush2.msra.mxu0 0.0
    %428 = vmatprep.subr.mxu0 0.0
    %429 = vmatpush2.msra.mxu0 0.0
    %430 = vmatprep.subr.mxu0 0.0
    %431 = vmatpush2.msra.mxu0 0.0
    %432 = vmatprep.subr.mxu0 0.0
    %433 = vmatpush2.msra.mxu0 0.0
    %434 = vmatprep.subr.mxu0 0.0
    %435 = vmatpush2.msra.mxu0 0.0
    %436 = vmatprep.subr.mxu0 0.0
    %437 = vmatpush2.msra.mxu0 0.0
    %438 = vmatprep.subr.mxu0 0.0
    %439 = vmatpush2.msra.mxu0 0.0
    %440 = vmatprep.subr.mxu0 0.0
    %441 = vmatpush2.msra.mxu0 0.0
    %442 = vmatprep.subr.mxu0 0.0
    %443 = vmatpush2.msra.mxu0 0.0
    %444 = vmatprep.subr.mxu0 0.0
    %445 = vmatpush2.msra.mxu0 0.0
    %446 = vmatprep.subr.mxu0 0.0
    %447 = vmatpush2.msra.mxu0 0.0
    %448 = vmatprep.subr.mxu0 0.0
    %449 = vmatpush2.msra.mxu0 0.0
    %450 = vmatprep.subr.mxu0 0.0
    %451 = vmatpush2.msra.mxu0 0.0
    %452 = vmatprep.subr.mxu0 0.0
    %453 = vmatpush2.msra.mxu0 0.0
    %454 = vmatprep.subr.mxu0 0.0
    %455 = vmatpush2.msra.mxu0 0.0
    %456 = vmatprep.mubr.f32.mxu0 0.0
    %457 = vmatmul.mubr.f32.gmra.mxu0 %v341
    %v458 = vpop.f32.mrf.mxu0
    %v459 = vadd.f32 %v338, %v458
    %v460 = vpop.f32.mrf.mxu0
    %461 = vmatprep.mubr.f32.mxu0 0.0
    %462 = vmatmul.mubr.f32.gmra.mxu0 %v344
    %v463 = vpop.f32.mrf.mxu0
    %v464 = vadd.f32 %v338, %v463
    %v465 = vpop.f32.mrf.mxu0
    %466 = vmatprep.mubr.f32.mxu0 0.0
    %467 = vmatmul.mubr.f32.gmra.mxu0 %v347
    %v468 = vpop.f32.mrf.mxu0
    %v469 = vadd.f32 %v338, %v468
    %v470 = vpop.f32.mrf.mxu0
    %471 = vmatprep.mubr.f32.mxu0 0.0
    %472 = vmatmul.mubr.f32.gmra.mxu0 %v350
    %v473 = vpop.f32.mrf.mxu0
    %v474 = vadd.f32 %v338, %v473
    %v475 = vpop.f32.mrf.mxu0
    %476 = vmatprep.mubr.f32.mxu0 0.0
    %477 = vmatmul.mubr.f32.gmra.mxu0 %v353
    %v478 = vpop.f32.mrf.mxu0
    %v479 = vadd.f32 %v338, %v478
    %v480 = vpop.f32.mrf.mxu0
    %481 = vmatprep.mubr.f32.mxu0 0.0
    %482 = vmatmul.mubr.f32.gmra.mxu0 %v356
    %v483 = vpop.f32.mrf.mxu0
    %v484 = vadd.f32 %v338, %v483
    %v485 = vpop.f32.mrf.mxu0
    %486 = vmatprep.mubr.f32.mxu0 0.0
    %487 = vmatmul.mubr.f32.gmra.mxu0 %v359
    %v488 = vpop.f32.mrf.mxu0
    %v489 = vadd.f32 %v338, %v488
    %v490 = vpop.f32.mrf.mxu0
    %491 = vmatprep.mubr.f32.mxu0 0.0
    %492 = vmatmul.mubr.f32.gmra.mxu0 %v362
    %v493 = vpop.f32.mrf.mxu0
    %v494 = vadd.f32 %v338, %v493
    %v495 = vpop.f32.mrf.mxu0
    %496 = vmatprep.mubr.f32.mxu0 0.0
    %497 = vmatmul.mubr.f32.gmra.mxu0 %v365
    %v498 = vpop.f32.mrf.mxu0
    %v499 = vadd.f32 %v338, %v498
    %v500 = vpop.f32.mrf.mxu0
    %501 = vmatprep.mubr.f32.mxu0 0.0
    %502 = vmatmul.mubr.f32.gmra.mxu0 %v368
    %v503 = vpop.f32.mrf.mxu0
    %v504 = vadd.f32 %v338, %v503
    %v505 = vpop.f32.mrf.mxu0
    %506 = vmatprep.mubr.f32.mxu0 0.0
    %507 = vmatmul.mubr.f32.gmra.mxu0 %v371
    %v508 = vpop.f32.mrf.mxu0
    %v509 = vadd.f32 %v338, %v508
    %v510 = vpop.f32.mrf.mxu0
    %511 = vmatprep.mubr.f32.mxu0 0.0
    %512 = vmatmul.mubr.f32.gmra.mxu0 %v374
    %v513 = vpop.f32.mrf.mxu0
    %v514 = vadd.f32 %v338, %v513
    %v515 = vpop.f32.mrf.mxu0
    %516 = vmatprep.mubr.f32.mxu0 0.0
    %517 = vmatmul.mubr.f32.gmra.mxu0 %v377
    %v518 = vpop.f32.mrf.mxu0
    %v519 = vadd.f32 %v338, %v518
    %v520 = vpop.f32.mrf.mxu0
    %521 = vmatprep.mubr.f32.mxu0 0.0
    %522 = vmatmul.mubr.f32.gmra.mxu0 %v380
    %v523 = vpop.f32.mrf.mxu0
    %v524 = vadd.f32 %v338, %v523
    %v525 = vpop.f32.mrf.mxu0
    %526 = vmatprep.mubr.f32.mxu0 0.0
    %527 = vmatmul.mubr.f32.gmra.mxu0 %v383
    %v528 = vpop.f32.mrf.mxu0
    %v529 = vadd.f32 %v338, %v528
    %v530 = vpop.f32.mrf.mxu0
    %531 = vmatprep.mubr.f32.mxu0 0.0
    %532 = vmatmul.mubr.f32.gmra.mxu0 %v386
    %v533 = vpop.f32.mrf.mxu0
    %v534 = vadd.f32 %v338, %v533
    %v535 = vpop.f32.mrf.mxu0
    %536 = vdwg.mxu0
    %v537 = vmax.f32 %v459, 0.0
    %v538 = vmax.f32 %v464, 0.0
    %v539 = vmax.f32 %v469, 0.0
    %v540 = vmax.f32 %v474, 0.0
    %v541 = vmax.f32 %v479, 0.0
    %v542 = vmax.f32 %v484, 0.0
    %v543 = vmax.f32 %v489, 0.0
    %v544 = vmax.f32 %v494, 0.0
    %v545 = vmax.f32 %v499, 0.0
    %v546 = vmax.f32 %v504, 0.0
    %v547 = vmax.f32 %v509, 0.0
    %v548 = vmax.f32 %v514, 0.0
    %v549 = vmax.f32 %v519, 0.0
    %v550 = vmax.f32 %v524, 0.0
    %v551 = vmax.f32 %v529, 0.0
    %v552 = vmax.f32 %v534, 0.0
    %v553 = vpack.c.bf16 %v538, %v537
    %v554 = vpack.c.bf16 %v540, %v539
    %v555 = vpack.c.bf16 %v542, %v541
    %v556 = vpack.c.bf16 %v544, %v543
    %v557 = vpack.c.bf16 %v546, %v545
    %v558 = vpack.c.bf16 %v548, %v547
    %v559 = vpack.c.bf16 %v550, %v549
    %v560 = vpack.c.bf16 %v552, %v551
    %v569 = vunpack.c.l.b16 %v553
    %v570 = vunpack.c.h.b16 %v553
    %v571 = vunpack.c.l.b16 %v554
    %v572 = vunpack.c.h.b16 %v554
    %v573 = vunpack.c.l.b16 %v555
    %v574 = vunpack.c.h.b16 %v555
    %v575 = vunpack.c.l.b16 %v556
    %v576 = vunpack.c.h.b16 %v556
    %v577 = vunpack.c.l.b16 %v557
    %v578 = vunpack.c.h.b16 %v557
    %v579 = vunpack.c.l.b16 %v558
    %v580 = vunpack.c.h.b16 %v558
    %v581 = vunpack.c.l.b16 %v559
    %v582 = vunpack.c.h.b16 %v559
    %v583 = vunpack.c.l.b16 %v560
    %v584 = vunpack.c.h.b16 %v560
    %v585 = vpack.c.b16 %v569, %v569
    %v586 = vpack.c.b16 %v570, %v570
    %v587 = vpack.c.b16 %v571, %v571
    %v588 = vpack.c.b16 %v572, %v572
    %v589 = vpack.c.b16 %v573, %v573
    %v590 = vpack.c.b16 %v574, %v574
    %v591 = vpack.c.b16 %v575, %v575
    %v592 = vpack.c.b16 %v576, %v576
    %v593 = vpack.c.b16 %v577, %v577
    %v594 = vpack.c.b16 %v578, %v578
    %v595 = vpack.c.b16 %v579, %v579
    %v596 = vpack.c.b16 %v580, %v580
    %v597 = vpack.c.b16 %v581, %v581
    %v598 = vpack.c.b16 %v582, %v582
    %v599 = vpack.c.b16 %v583, %v583
    %v600 = vpack.c.b16 %v584, %v584
    %vm617 = vcmask 257024
    %618 = vst.msk [vmem:[%s4] sm:$0xf] %vm617, %v585
    %619 = vst.msk [vmem:[%s4 + $0x4] sm:$0xf] %vm617, %v586
    %620 = vst.msk [vmem:[%s4 + $0x8] sm:$0xf] %vm617, %v587
    %621 = vst.msk [vmem:[%s4 + $0xc] sm:$0xf] %vm617, %v588
    %622 = vst.msk [vmem:[%s4 + $0x10] sm:$0xf] %vm617, %v589
    %623 = vst.msk [vmem:[%s4 + $0x14] sm:$0xf] %vm617, %v590
    %624 = vst.msk [vmem:[%s4 + $0x18] sm:$0xf] %vm617, %v591
    %625 = vst.msk [vmem:[%s4 + $0x1c] sm:$0xf] %vm617, %v592
    %626 = vst.msk [vmem:[%s4 + $0x20] sm:$0xf] %vm617, %v593
    %627 = vst.msk [vmem:[%s4 + $0x24] sm:$0xf] %vm617, %v594
    %628 = vst.msk [vmem:[%s4 + $0x28] sm:$0xf] %vm617, %v595
    %629 = vst.msk [vmem:[%s4 + $0x2c] sm:$0xf] %vm617, %v596
    %630 = vst.msk [vmem:[%s4 + $0x30] sm:$0xf] %vm617, %v597
    %631 = vst.msk [vmem:[%s4 + $0x34] sm:$0xf] %vm617, %v598
    %632 = vst.msk [vmem:[%s4 + $0x38] sm:$0xf] %vm617, %v599
    %633 = vst.msk [vmem:[%s4 + $0x3c] sm:$0xf] %vm617, %v600
  $region25: #{dmon_forward.3} parent=0 // pred_fallthru
    _
  // Predicated region
  $region26: #{dmon_forward.3} parent=0 // pred_check
    _
  $region27: #{dmon_forward.3} parent=0 // pred_check_branch
    %635 = sbr.rel (0) target = $region29
  $region28: #{dmon_forward.3} parent=0 // pred_region
    _
  $region29: #{dmon_forward.3} parent=0 // pred_fallthru
    _
  // Predicated region
  $region30: #{dmon_forward.3} parent=0 // pred_check
    _
  $region31: #{dmon_forward.3} parent=0 // pred_check_branch
    %637 = sbr.rel (0) target = $region33
  $region32: #{dmon_forward.3} parent=0 // pred_region
    _
  $region33: #{dmon_forward.3} parent=0 // pred_fallthru
    _

// kernel: dmon_forward.5
$region0: #{dmon_forward.5}
  #allocation0 [shape = 'u32[]', space=smem, size = 0x4, offset = 0x4, fixed_abs, tag = 'smem constant byte address 0x4 - core index']
  #allocation1 [shape = 'u32[144,128]{1,0:T(1,128)}', space=vmem, size = 0x12000, scoped, tag = 'internal scratch']
  %s0 = inlined_call_operand.vmem [shape: bf16[128,128], index: 0, kind: input, shape index: {}]
  %s1 = inlined_call_operand.vmem [shape: bf16[128,4], index: 1, kind: input, shape index: {}]
  %s2 = inlined_call_operand.vmem [shape: f32[128,4], index: 2, kind: input, shape index: {}]
  %s3 = inlined_call_operand.vmem [shape: f32[1,4,4], index: 3, kind: output, shape index: {0}]
  %s4 = inlined_call_operand.vmem [shape: f32[1,1,4], index: 4, kind: output, shape index: {1}]
  %5 = xla_tuple %s3, %s4
  %s6 = sld [smem:[#allocation0]]
  $region34: #{dmon_forward.5} parent=0
    _
  %s8 = ssub.s32 1, %s6
  %s9 = scalar_select 0, %s8, %s6
  // Predicated region
  $region2: #{dmon_forward.5} parent=0 // pred_check
    _
  $region3: #{dmon_forward.5} parent=0 // pred_check_branch
    %11 = sbr.rel (0) target = $region5
  $region4: #{dmon_forward.5} parent=0 // pred_region
    _
  $region5: #{dmon_forward.5} parent=0 // pred_fallthru
    _
  // Predicated region
  $region6: #{dmon_forward.5} parent=0 // pred_check
    _
  $region7: #{dmon_forward.5} parent=0 // pred_check_branch
    %13 = sbr.rel (0) target = $region9
  $region8: #{dmon_forward.5} parent=0 // pred_region
    _
  $region9: #{dmon_forward.5} parent=0 // pred_fallthru
    _
  // Predicated region
  $region10: #{dmon_forward.5} parent=0 // pred_check
    _
  $region11: #{dmon_forward.5} parent=0 // pred_check_branch
    %15 = sbr.rel (0) target = $region13
  $region12: #{dmon_forward.5} parent=0 // pred_region
    _
  $region13: #{dmon_forward.5} parent=0 // pred_fallthru
    _
  %p17 = scmp.eq.s32.totalorder 0, 0
  // Predicated region
  $region14: #{dmon_forward.5} parent=0 // pred_check
    %p18 = pneg %p17
  $region15: #{dmon_forward.5} parent=0 // pred_check_branch
    %20 = sbr.rel (%p18) target = $region17
  $region16: #{dmon_forward.5} parent=0 // pred_region
    %vm21 = vcmask 27648
    %22 = vst.msk [vmem:[%s3] sm:$0xf] %vm21, 0.0
    %vm23 = vcmask 24576
    %24 = vst.msk [vmem:[%s4] sm:$0x1] %vm23, 0.0
  $region17: #{dmon_forward.5} parent=0 // pred_fallthru
    _
  %v25 = vld [vmem:[%s0] sm:$0xf]
  %v26 = vld [vmem:[%s0 + $0x4] sm:$0xf]
  %v27 = vld [vmem:[%s0 + $0x8] sm:$0xf]
  %v28 = vld [vmem:[%s0 + $0xc] sm:$0xf]
  %v29 = vld [vmem:[%s0 + $0x10] sm:$0xf]
  %v30 = vld [vmem:[%s0 + $0x14] sm:$0xf]
  %v31 = vld [vmem:[%s0 + $0x18] sm:$0xf]
  %v32 = vld [vmem:[%s0 + $0x1c] sm:$0xf]
  %v33 = vld [vmem:[%s0 + $0x20] sm:$0xf]
  %v34 = vld [vmem:[%s0 + $0x24] sm:$0xf]
  %v35 = vld [vmem:[%s0 + $0x28] sm:$0xf]
  %v36 = vld [vmem:[%s0 + $0x2c] sm:$0xf]
  %v37 = vld [vmem:[%s0 + $0x30] sm:$0xf]
  %v38 = vld [vmem:[%s0 + $0x34] sm:$0xf]
  %v39 = vld [vmem:[%s0 + $0x38] sm:$0xf]
  %v40 = vld [vmem:[%s0 + $0x3c] sm:$0xf]
  %v41 = vld [vmem:[%s1] sm:$0xf]
  %v42 = vld [vmem:[%s1 + $0x4] sm:$0xf]
  %v43 = vld [vmem:[%s1 + $0x8] sm:$0xf]
  %v44 = vld [vmem:[%s1 + $0xc] sm:$0xf]
  %v45 = vld [vmem:[%s1 + $0x10] sm:$0xf]
  %v46 = vld [vmem:[%s1 + $0x14] sm:$0xf]
  %v47 = vld [vmem:[%s1 + $0x18] sm:$0xf]
  %v48 = vld [vmem:[%s1 + $0x1c] sm:$0xf]
  %v49 = vld [vmem:[%s1 + $0x20] sm:$0xf]
  %v50 = vld [vmem:[%s1 + $0x24] sm:$0xf]
  %v51 = vld [vmem:[%s1 + $0x28] sm:$0xf]
  %v52 = vld [vmem:[%s1 + $0x2c] sm:$0xf]
  %v53 = vld [vmem:[%s1 + $0x30] sm:$0xf]
  %v54 = vld [vmem:[%s1 + $0x34] sm:$0xf]
  %v55 = vld [vmem:[%s1 + $0x38] sm:$0xf]
  %v56 = vld [vmem:[%s1 + $0x3c] sm:$0xf]
  %v73 = vunpack.c.l.b16 %v25
  %v74 = vunpack.c.l.b16 %v26
  %v75 = vunpack.c.l.b16 %v27
  %v76 = vunpack.c.l.b16 %v28
  %v77 = vunpack.c.l.b16 %v29
  %v78 = vunpack.c.l.b16 %v30
  %v79 = vunpack.c.l.b16 %v31
  %v80 = vunpack.c.l.b16 %v32
  %v81 = vunpack.c.l.b16 %v33
  %v82 = vunpack.c.l.b16 %v34
  %v83 = vunpack.c.l.b16 %v35
  %v84 = vunpack.c.l.b16 %v36
  %v85 = vunpack.c.l.b16 %v37
  %v86 = vunpack.c.l.b16 %v38
  %v87 = vunpack.c.l.b16 %v39
  %v88 = vunpack.c.l.b16 %v40
  %v89 = vpack.c.b16 %v74, %v73
  %v90 = vpack.c.b16 %v76, %v75
  %v91 = vpack.c.b16 %v78, %v77
  %v92 = vpack.c.b16 %v80, %v79
  %v93 = vpack.c.b16 %v82, %v81
  %v94 = vpack.c.b16 %v84, %v83
  %v95 = vpack.c.b16 %v86, %v85
  %v96 = vpack.c.b16 %v88, %v87
  %v121 = vunpack.c.l.b16 %v41
  %v122 = vunpack.c.l.b16 %v42
  %v123 = vunpack.c.l.b16 %v43
  %v124 = vunpack.c.l.b16 %v44
  %v125 = vunpack.c.l.b16 %v45
  %v126 = vunpack.c.l.b16 %v46
  %v127 = vunpack.c.l.b16 %v47
  %v128 = vunpack.c.l.b16 %v48
  %v129 = vunpack.c.l.b16 %v49
  %v130 = vunpack.c.l.b16 %v50
  %v131 = vunpack.c.l.b16 %v51
  %v132 = vunpack.c.l.b16 %v52
  %v133 = vunpack.c.l.b16 %v53
  %v134 = vunpack.c.l.b16 %v54
  %v135 = vunpack.c.l.b16 %v55
  %v136 = vunpack.c.l.b16 %v56
  %v137 = vpack.c.b16 %v122, %v121
  %v138 = vpack.c.b16 %v124, %v123
  %v139 = vpack.c.b16 %v126, %v125
  %v140 = vpack.c.b16 %v128, %v127
  %v141 = vpack.c.b16 %v130, %v129
  %v142 = vpack.c.b16 %v132, %v131
  %v143 = vpack.c.b16 %v134, %v133
  %v144 = vpack.c.b16 %v136, %v135
  %153 = vmatprep.subr.bf16.mxu0 0
  %154 = vmatpush1.bf16.msra.mxu0 %v144
  %155 = vmatprep.subr.bf16.mxu0 0
  %156 = vmatpush1.bf16.msra.mxu0 %v143
  %157 = vmatprep.subr.bf16.mxu0 0
  %158 = vmatpush1.bf16.msra.mxu0 %v142
  %159 = vmatprep.subr.bf16.mxu0 0
  %160 = vmatpush1.bf16.msra.mxu0 %v141
  %161 = vmatprep.subr.bf16.mxu0 0
  %162 = vmatpush1.bf16.msra.mxu0 %v140
  %163 = vmatprep.subr.bf16.mxu0 0
  %164 = vmatpush1.bf16.msra.mxu0 %v139
  %165 = vmatprep.subr.bf16.mxu0 0
  %166 = vmatpush1.bf16.msra.mxu0 %v138
  %167 = vmatprep.subr.bf16.mxu0 0
  %168 = vmatpush1.bf16.msra.mxu0 %v137
  %169 = vmatprep.subr.bf16.mxu0 0
  %170 = vmatpush2.bf16.msra.mxu0 0
  %171 = vmatprep.subr.bf16.mxu0 0
  %172 = vmatpush2.bf16.msra.mxu0 0
  %173 = vmatprep.subr.bf16.mxu0 0
  %174 = vmatpush2.bf16.msra.mxu0 0
  %175 = vmatprep.subr.bf16.mxu0 0
  %176 = vmatpush2.bf16.msra.mxu0 0
  %177 = vmatprep.subr.bf16.mxu0 0
  %178 = vmatpush2.bf16.msra.mxu0 0
  %179 = vmatprep.subr.bf16.mxu0 0
  %180 = vmatpush2.bf16.msra.mxu0 0
  %181 = vmatprep.subr.bf16.mxu0 0
  %182 = vmatpush2.bf16.msra.mxu0 0
  %183 = vmatprep.subr.bf16.mxu0 0
  %184 = vmatpush2.bf16.msra.mxu0 0
  %185 = vmatprep.mubr.bf16.mxu0 0
  %186 = vmatmul.mubr.bf16.gmra.mxu0 %v89
  %v187 = vpop.f32.mrf.mxu0
  %v188 = vadd.f32 0.0, %v187
  %v189 = vpop.f32.mrf.mxu0
  %v190 = vpop.f32.mrf.mxu0
  %v191 = vadd.f32 0.0, %v190
  %v192 = vpop.f32.mrf.mxu0
  %193 = vmatprep.mubr.bf16.mxu0 0
  %194 = vmatmul.mubr.bf16.gmra.mxu0 %v90
  %v195 = vpop.f32.mrf.mxu0
  %v196 = vadd.f32 0.0, %v195
  %v197 = vpop.f32.mrf.mxu0
  %v198 = vpop.f32.mrf.mxu0
  %v199 = vadd.f32 0.0, %v198
  %v200 = vpop.f32.mrf.mxu0
  %201 = vmatprep.mubr.bf16.mxu0 0
  %202 = vmatmul.mubr.bf16.gmra.mxu0 %v91
  %v203 = vpop.f32.mrf.mxu0
  %v204 = vadd.f32 0.0, %v203
  %v205 = vpop.f32.mrf.mxu0
  %v206 = vpop.f32.mrf.mxu0
  %v207 = vadd.f32 0.0, %v206
  %v208 = vpop.f32.mrf.mxu0
  %209 = vmatprep.mubr.bf16.mxu0 0
  %210 = vmatmul.mubr.bf16.gmra.mxu0 %v92
  %v211 = vpop.f32.mrf.mxu0
  %v212 = vadd.f32 0.0, %v211
  %v213 = vpop.f32.mrf.mxu0
  %v214 = vpop.f32.mrf.mxu0
  %v215 = vadd.f32 0.0, %v214
  %v216 = vpop.f32.mrf.mxu0
  %217 = vmatprep.mubr.bf16.mxu0 0
  %218 = vmatmul.mubr.bf16.gmra.mxu0 %v93
  %v219 = vpop.f32.mrf.mxu0
  %v220 = vadd.f32 0.0, %v219
  %v221 = vpop.f32.mrf.mxu0
  %v222 = vpop.f32.mrf.mxu0
  %v223 = vadd.f32 0.0, %v222
  %v224 = vpop.f32.mrf.mxu0
  %225 = vmatprep.mubr.bf16.mxu0 0
  %226 = vmatmul.mubr.bf16.gmra.mxu0 %v94
  %v227 = vpop.f32.mrf.mxu0
  %v228 = vadd.f32 0.0, %v227
  %v229 = vpop.f32.mrf.mxu0
  %v230 = vpop.f32.mrf.mxu0
  %v231 = vadd.f32 0.0, %v230
  %v232 = vpop.f32.mrf.mxu0
  %233 = vmatprep.mubr.bf16.mxu0 0
  %234 = vmatmul.mubr.bf16.gmra.mxu0 %v95
  %v235 = vpop.f32.mrf.mxu0
  %v236 = vadd.f32 0.0, %v235
  %v237 = vpop.f32.mrf.mxu0
  %v238 = vpop.f32.mrf.mxu0
  %v239 = vadd.f32 0.0, %v238
  %v240 = vpop.f32.mrf.mxu0
  %241 = vmatprep.mubr.bf16.mxu0 0
  %242 = vmatmul.mubr.bf16.gmra.mxu0 %v96
  %v243 = vpop.f32.mrf.mxu0
  %v244 = vadd.f32 0.0, %v243
  %v245 = vpop.f32.mrf.mxu0
  %v246 = vpop.f32.mrf.mxu0
  %v247 = vadd.f32 0.0, %v246
  %v248 = vpop.f32.mrf.mxu0
  %249 = vdwg.mxu0
  %v250 = vld [vmem:[%s3] sm:$0xf]
  %v251 = vld [vmem:[%s2] sm:$0xff]
  %v252 = vld [vmem:[%s2 + $0x8] sm:$0xff]
  %v253 = vld [vmem:[%s2 + $0x10] sm:$0xff]
  %v254 = vld [vmem:[%s2 + $0x18] sm:$0xff]
  %v255 = vld [vmem:[%s2 + $0x20] sm:$0xff]
  %v256 = vld [vmem:[%s2 + $0x28] sm:$0xff]
  %v257 = vld [vmem:[%s2 + $0x30] sm:$0xff]
  %v258 = vld [vmem:[%s2 + $0x38] sm:$0xff]
  %v259 = vld [vmem:[%s2 + $0x40] sm:$0xff]
  %v260 = vld [vmem:[%s2 + $0x48] sm:$0xff]
  %v261 = vld [vmem:[%s2 + $0x50] sm:$0xff]
  %v262 = vld [vmem:[%s2 + $0x58] sm:$0xff]
  %v263 = vld [vmem:[%s2 + $0x60] sm:$0xff]
  %v264 = vld [vmem:[%s2 + $0x68] sm:$0xff]
  %v265 = vld [vmem:[%s2 + $0x70] sm:$0xff]
  %v266 = vld [vmem:[%s2 + $0x78] sm:$0xff]
  %267 = vxpose.xlu0.b32.start [1/16] %v251, 128
  %268 = vxpose.xlu0.b32.cont [2/16] %v252, 128
  %269 = vxpose.xlu0.b32.cont [3/16] %v253, 128
  %270 = vxpose.xlu0.b32.cont [4/16] %v254, 128
  %271 = vxpose.xlu0.b32.cont [5/16] %v255, 128
  %272 = vxpose.xlu0.b32.cont [6/16] %v256, 128
  %273 = vxpose.xlu0.b32.cont [7/16] %v257, 128
  %274 = vxpose.xlu0.b32.cont [8/16] %v258, 128
  %275 = vxpose.xlu0.b32.cont [9/16] %v259, 128
  %276 = vxpose.xlu0.b32.cont [10/16] %v260, 128
  %277 = vxpose.xlu0.b32.cont [11/16] %v261, 128
  %278 = vxpose.xlu0.b32.cont [12/16] %v262, 128
  %279 = vxpose.xlu0.b32.cont [13/16] %v263, 128
  %280 = vxpose.xlu0.b32.cont [14/16] %v264, 128
  %281 = vxpose.xlu0.b32.cont [15/16] %v265, 128
  %282 = vxpose.xlu0.b32.end [16/16] %v266, 128
  %v283 = vpop.trf.xlu0
  %v284 = vpop.trf.xlu0
  %v285 = vpop.trf.xlu0
  %v286 = vpop.trf.xlu0
  %v287 = vpop.trf.xlu0
  %v288 = vpop.trf.xlu0
  %v289 = vpop.trf.xlu0
  %v290 = vpop.trf.xlu0
  %v291 = vpop.trf.xlu0
  %v292 = vpop.trf.xlu0
  %v293 = vpop.trf.xlu0
  %v294 = vpop.trf.xlu0
  %v295 = vpop.trf.xlu0
  %v296 = vpop.trf.xlu0
  %v297 = vpop.trf.xlu0
  %v298 = vpop.trf.xlu0
  %299 = vmatprep.subr.mxu0 0.0
  %300 = vmatpush1.msra.mxu0 %v247
  %301 = vmatprep.subr.mxu0 0.0
  %302 = vmatpush1.msra.mxu0 %v244
  %303 = vmatprep.subr.mxu0 0.0
  %304 = vmatpush1.msra.mxu0 %v239
  %305 = vmatprep.subr.mxu0 0.0
  %306 = vmatpush1.msra.mxu0 %v236
  %307 = vmatprep.subr.mxu0 0.0
  %308 = vmatpush1.msra.mxu0 %v231
  %309 = vmatprep.subr.mxu0 0.0
  %310 = vmatpush1.msra.mxu0 %v228
  %311 = vmatprep.subr.mxu0 0.0
  %312 = vmatpush1.msra.mxu0 %v223
  %313 = vmatprep.subr.mxu0 0.0
  %314 = vmatpush1.msra.mxu0 %v220
  %315 = vmatprep.subr.mxu0 0.0
  %316 = vmatpush1.msra.mxu0 %v215
  %317 = vmatprep.subr.mxu0 0.0
  %318 = vmatpush1.msra.mxu0 %v212
  %319 = vmatprep.subr.mxu0 0.0
  %320 = vmatpush1.msra.mxu0 %v207
  %321 = vmatprep.subr.mxu0 0.0
  %322 = vmatpush1.msra.mxu0 %v204
  %323 = vmatprep.subr.mxu0 0.0
  %324 = vmatpush1.msra.mxu0 %v199
  %325 = vmatprep.subr.mxu0 0.0
  %326 = vmatpush1.msra.mxu0 %v196
  %327 = vmatprep.subr.mxu0 0.0
  %328 = vmatpush1.msra.mxu0 %v191
  %329 = vmatprep.subr.mxu0 0.0
  %330 = vmatpush1.msra.mxu0 %v188
  %331 = vmatprep.subr.mxu0 0.0
  %332 = vmatpush2.msra.mxu0 0.0
  %333 = vmatprep.subr.mxu0 0.0
  %334 = vmatpush2.msra.mxu0 0.0
  %335 = vmatprep.subr.mxu0 0.0
  %336 = vmatpush2.msra.mxu0 0.0
  %337 = vmatprep.subr.mxu0 0.0
  %338 = vmatpush2.msra.mxu0 0.0
  %339 = vmatprep.subr.mxu0 0.0
  %340 = vmatpush2.msra.mxu0 0.0
  %341 = vmatprep.subr.mxu0 0.0
  %342 = vmatpush2.msra.mxu0 0.0
  %343 = vmatprep.subr.mxu0 0.0
  %344 = vmatpush2.msra.mxu0 0.0
  %345 = vmatprep.subr.mxu0 0.0
  %346 = vmatpush2.msra.mxu0 0.0
  %347 = vmatprep.subr.mxu0 0.0
  %348 = vmatpush2.msra.mxu0 0.0
  %349 = vmatprep.subr.mxu0 0.0
  %350 = vmatpush2.msra.mxu0 0.0
  %351 = vmatprep.subr.mxu0 0.0
  %352 = vmatpush2.msra.mxu0 0.0
  %353 = vmatprep.subr.mxu0 0.0
  %354 = vmatpush2.msra.mxu0 0.0
  %355 = vmatprep.subr.mxu0 0.0
  %356 = vmatpush2.msra.mxu0 0.0
  %357 = vmatprep.subr.mxu0 0.0
  %358 = vmatpush2.msra.mxu0 0.0
  %359 = vmatprep.subr.mxu0 0.0
  %360 = vmatpush2.msra.mxu0 0.0
  %361 = vmatprep.subr.mxu0 0.0
  %362 = vmatpush2.msra.mxu0 0.0
  %363 = vmatprep.mubr.f32.mxu0 0.0
  %364 = vmatmul.mubr.f32.gmra.mxu0 %v283
  %v365 = vpop.f32.mrf.mxu0
  %v366 = vadd.f32 0.0, %v365
  %v367 = vpop.f32.mrf.mxu0
  %368 = vdwg.mxu0
  %v369 = vadd.f32 %v250, %v366
  %vm370 = vcmask 27648
  %371 = vst.msk [vmem:[%s3] sm:$0xf] %vm370, %v369
  %v372 = vld [vmem:[%s4] sm:$0x1]
  %vm373 = vcmask 31744
  %v374 = vsel %vm373, %v188, 0.0
  %v375 = vsel %vm373, %v191, 0.0
  %v376 = vadd.f32 %v374, %v375
  %v377 = vsel %vm373, %v196, 0.0
  %v378 = vadd.f32 %v376, %v377
  %v379 = vsel %vm373, %v199, 0.0
  %v380 = vadd.f32 %v378, %v379
  %v381 = vsel %vm373, %v204, 0.0
  %v382 = vadd.f32 %v380, %v381
  %v383 = vsel %vm373, %v207, 0.0
  %v384 = vadd.f32 %v382, %v383
  %v385 = vsel %vm373, %v212, 0.0
  %v386 = vadd.f32 %v384, %v385
  %v387 = vsel %vm373, %v215, 0.0
  %v388 = vadd.f32 %v386, %v387
  %v389 = vsel %vm373, %v220, 0.0
  %v390 = vadd.f32 %v388, %v389
  %v391 = vsel %vm373, %v223, 0.0
  %v392 = vadd.f32 %v390, %v391
  %v393 = vsel %vm373, %v228, 0.0
  %v394 = vadd.f32 %v392, %v393
  %v395 = vsel %vm373, %v231, 0.0
  %v396 = vadd.f32 %v394, %v395
  %v397 = vsel %vm373, %v236, 0.0
  %v398 = vadd.f32 %v396, %v397
  %v399 = vsel %vm373, %v239, 0.0
  %v400 = vadd.f32 %v398, %v399
  %v401 = vsel %vm373, %v244, 0.0
  %v402 = vadd.f32 %v400, %v401
  %v403 = vsel %vm373, %v247, 0.0
  %v404 = vadd.f32 %v402, %v403
  %v405 = vrot.slane %v404, 4
  %v406 = vadd.f32 %v404, %v405
  %v407 = vrot.slane %v406, 2
  %v408 = vadd.f32 %v406, %v407
  %v409 = vrot.slane %v408, 1
  %v410 = vadd.f32 %v408, %v409
  %v411 = vadd.f32 %v372, %v410
  %vm412 = vcmask 24576
  %413 = vst.msk [vmem:[%s4] sm:$0x1] %vm412, %v411
  // Predicated region
  $region18: #{dmon_forward.5} parent=0 // pred_check
    _
  $region19: #{dmon_forward.5} parent=0 // pred_check_branch
    %415 = sbr.rel (0) target = $region21
  $region20: #{dmon_forward.5} parent=0 // pred_region
    _
  $region21: #{dmon_forward.5} parent=0 // pred_fallthru
    _
  // Predicated region
  $region22: #{dmon_forward.5} parent=0 // pred_check
    _
  $region23: #{dmon_forward.5} parent=0 // pred_check_branch
    %417 = sbr.rel (0) target = $region25
  $region24: #{dmon_forward.5} parent=0 // pred_region
    _
  $region25: #{dmon_forward.5} parent=0 // pred_fallthru
    _
  // Predicated region
  $region26: #{dmon_forward.5} parent=0 // pred_check
    _
  $region27: #{dmon_forward.5} parent=0 // pred_check_branch
    %419 = sbr.rel (0) target = $region29
  $region28: #{dmon_forward.5} parent=0 // pred_region
    _
  $region29: #{dmon_forward.5} parent=0 // pred_fallthru
    _
  // Predicated region
  $region30: #{dmon_forward.5} parent=0 // pred_check
    _
  $region31: #{dmon_forward.5} parent=0 // pred_check_branch
    %421 = sbr.rel (0) target = $region33
  $region32: #{dmon_forward.5} parent=0 // pred_region
    _
  $region33: #{dmon_forward.5} parent=0 // pred_fallthru
    _

</llo_original>
